<compile_context>
chip_gen: v7x
topology: tpu7x:2x2x1
jax: 0.10.0
libtpu: 0.0.40
codegen_flags: <defaults>
</compile_context>

<pallas_src>
import functools

import jax
import jax.numpy as jnp
from jax import lax
from jax.experimental import pallas as pl
from jax.experimental.pallas import tpu as pltpu


def _eesp_kernel(w_ref, shift_ref, mask_ref, x_ref, o_ref, *,
                 cin, cout, ksize, dilation, pad, H, W):
    """One image per grid step, fully lane-dense.

    w_ref:     VMEM (cin*k*k, cout, 1) f32   BN-scale-folded conv weights
    shift_ref: VMEM (cout, 1) f32            beta - mean * scale
    mask_ref:  VMEM (k*k, 1, H*W) f32        0/1 validity mask per (kh, kw) tap
    x_ref:     VMEM (1, cin, 1, H*W)         flattened input image (NCHW order)
    o_ref:     VMEM (1, cout, H*W)           flattened output image
    """
    HW = H * W
    acc = jnp.zeros((cout, HW), jnp.float32)   # (8, 256) = 2 dense vregs

    # Fully unrolled: 9*cin broadcast FMAs, each covering every output channel.
    for ci in range(cin):
        xi = x_ref[0, ci].astype(jnp.float32)                  # (1, HW)
        for kh in range(ksize):
            dh = kh * dilation - pad
            for kw in range(ksize):
                dw = kw * dilation - pad
                s = dh * W + dw                                 # flat tap shift
                rolled = xi if s == 0 else pltpu.roll(xi, shift=(-s) % HW, axis=1)
                # Zero out-of-image (halo) positions -- replaces jnp.pad.
                win = rolled * mask_ref[kh * ksize + kw]        # (1, HW)
                wv = w_ref[(ci * ksize + kh) * ksize + kw]      # (cout, 1)
                acc = acc + wv * win            # (cout,1)*(1,HW) -> (cout,HW)

    # Fused BatchNorm shift + ReLU (scale already folded into the weights).
    y = jnp.maximum(acc + shift_ref[...], 0.0)
    o_ref[0] = y.astype(o_ref.dtype)            # dense (cout, HW) store


def eesp_forward(x_nchw, weight, gamma, beta, running_mean, running_var,
                 *, dilation=1, eps=1e-5):
    """x_nchw: (N, Cin, H, W). weight: (Cout, Cin, k, k) PyTorch layout."""
    N, Cin, H, W = x_nchw.shape
    Cout, _, k, _ = weight.shape
    pad = dilation                   # PyTorch module uses padding=dilation
    # 'same' output shape requires padding == dilation*(k-1)//2 (true for k=3).
    assert 2 * pad == dilation * (k - 1), (
        "EESP uses padding=dilation; same-shape output needs kernel_size=3")
    # TODO(synk): generalize to other kernel sizes (output spatial size changes).
    HW = H * W

    # Fold BN scale into the conv weights (exact: conv is linear).
    scale = gamma / jnp.sqrt(running_var + eps)                     # (Cout,)
    shift = (beta - running_mean * scale).astype(jnp.float32).reshape(Cout, 1)
    w_f = (weight.astype(jnp.float32)
           * scale.astype(jnp.float32)[:, None, None, None])        # (Cout,Cin,k,k)
    # (Cin*k*k, Cout, 1); row index = (ci*k + kh)*k + kw (matches the kernel).
    w_b = jnp.transpose(w_f, (1, 2, 3, 0)).reshape(Cin * k * k, Cout, 1)

    # Static 0/1 validity masks per (kh, kw) tap -- replaces the padded halo.
    p = jnp.arange(HW, dtype=jnp.int32)
    hh, ww = p // W, p % W
    masks = []
    for kh in range(k):
        for kw in range(k):
            dh, dw = kh * dilation - pad, kw * dilation - pad
            masks.append((hh + dh >= 0) & (hh + dh < H)
                         & (ww + dw >= 0) & (ww + dw < W))
    mask_arr = jnp.stack(masks).astype(jnp.float32).reshape(k * k, 1, HW)

    # Free, contiguous reshape: spatial goes on the lane axis (H*W lanes).
    x_flat = x_nchw.reshape(N, Cin, 1, HW)

    kernel = functools.partial(_eesp_kernel, cin=Cin, cout=Cout, ksize=k,
                               dilation=dilation, pad=pad, H=H, W=W)

    out = pl.pallas_call(
        kernel,
        out_shape=jax.ShapeDtypeStruct((N, Cout, HW), jnp.float32),
        grid_spec=pltpu.PrefetchScalarGridSpec(
            num_scalar_prefetch=0,
            grid=(N,),
            in_specs=[
                # Small constant tables: constant block index -> DMA'd once.
                pl.BlockSpec((Cin * k * k, Cout, 1), lambda n: (0, 0, 0)),
                pl.BlockSpec((Cout, 1), lambda n: (0, 0)),
                pl.BlockSpec((k * k, 1, HW), lambda n: (0, 0, 0)),
                # One flattened image per grid step (unpadded -- no jnp.pad).
                pl.BlockSpec((1, Cin, 1, HW), lambda n: (n, 0, 0, 0)),
            ],
            out_specs=pl.BlockSpec((1, Cout, HW), lambda n: (n, 0, 0)),
        ),
        compiler_params=pltpu.CompilerParams(
            dimension_semantics=("parallel",),   # batch axis -> megacore/dual-TC
            vmem_limit_bytes=32 * 1024 * 1024),  # safe on v5e/v6e/v7x
    )(w_b, shift, mask_arr, x_flat)

    return out.reshape(N, Cout, H, W)            # free reshape back to NCHW


def _reference(x_nchw, weight, gamma, beta, running_mean, running_var,
               *, dilation=1, eps=1e-5):
    # Pure-JAX reference (NCHW conv via lax) for correctness checking.
    d = dilation
    y = lax.conv_general_dilated(
        x_nchw, weight,
        window_strides=(1, 1),
        padding=[(d, d), (d, d)],
        rhs_dilation=(d, d),
        dimension_numbers=("NCHW", "OIHW", "NCHW"))
    scale = gamma / jnp.sqrt(running_var + eps)
    shift = beta - running_mean * scale
    y = y * scale[None, :, None, None] + shift[None, :, None, None]
    return jnp.maximum(y, 0.0)


if __name__ == "__main__":
    key = jax.random.PRNGKey(0)
    k_x, k_w, k_g, k_b, k_m, k_v = jax.random.split(key, 6)

    N, Cin, Cout, H, W = 2, 4, 8, 16, 16
    ksize, dilation = 3, 2

    x = jax.random.normal(k_x, (N, Cin, H, W), jnp.float32)
    weight = jax.random.normal(k_w, (Cout, Cin, ksize, ksize), jnp.float32) * 0.1
    gamma = 1.0 + 0.1 * jax.random.normal(k_g, (Cout,), jnp.float32)
    beta = 0.1 * jax.random.normal(k_b, (Cout,), jnp.float32)
    running_mean = 0.1 * jax.random.normal(k_m, (Cout,), jnp.float32)
    running_var = jnp.abs(jax.random.normal(k_v, (Cout,), jnp.float32)) + 0.5

    out = eesp_forward(x, weight, gamma, beta, running_mean, running_var,
                       dilation=dilation)
    out = jax.block_until_ready(out)

    ref = _reference(x, weight, gamma, beta, running_mean, running_var,
                     dilation=dilation)
    assert out.shape == (N, Cout, H, W)
    assert jnp.allclose(out, ref, atol=1e-4, rtol=1e-4), "mismatch vs reference"

    print("KERNEL_OK")
</pallas_src>

<mosaic_0001>
module attributes {stable_mosaic.version = 11 : i64} {
  func.func @_eesp_kernel(%arg0: i32, %arg1: memref<36x8x1xf32, #tpu.memory_space<vmem>>, %arg2: memref<8x1xf32, #tpu.memory_space<vmem>>, %arg3: memref<9x1x256xf32, #tpu.memory_space<vmem>>, %arg4: memref<1x4x1x256xf32, #tpu.memory_space<vmem>>, %arg5: memref<1x8x256xf32, #tpu.memory_space<vmem>>) attributes {dimension_semantics = [#tpu.dimension_semantics<parallel>], iteration_bounds = array<i64: 2>, scalar_prefetch = 0 : i64, scratch_operands = 0 : i64, tpu.core_type = #tpu.core_type<tc>, window_params = [{pipeline_mode = #tpu.pipeline_mode<synchronous>, transform_indices = @transform_0, window_bounds = array<i64: 36, 8, 1>}, {pipeline_mode = #tpu.pipeline_mode<synchronous>, transform_indices = @transform_1, window_bounds = array<i64: 8, 1>}, {pipeline_mode = #tpu.pipeline_mode<synchronous>, transform_indices = @transform_2, window_bounds = array<i64: 9, 1, 256>}, {transform_indices = @transform_3, window_bounds = array<i64: 1, 4, 1, 256>}, {transform_indices = @transform_4, window_bounds = array<i64: 1, 8, 256>}]} {
    %cst = arith.constant 0.000000e+00 : f32
    %0 = vector.broadcast %cst : f32 to vector<8x256xf32>
    %c0 = arith.constant 0 : index
    %c0_0 = arith.constant 0 : index
    %c0_1 = arith.constant 0 : index
    %c0_2 = arith.constant 0 : index
    %1 = vector.load %arg4[%c0, %c0_0, %c0_1, %c0_2] : memref<1x4x1x256xf32, #tpu.memory_space<vmem>>, vector<1x1x1x256xf32>
    %2 = vector.shape_cast %1 : vector<1x1x1x256xf32> to vector<1x256xf32>
    %c34_i32 = arith.constant 34 : i32
    %3 = tpu.dynamic_rotate %2 by %c34_i32 dim 1 : vector<1x256xf32>, i32 -> vector<1x256xf32>
    %c0_3 = arith.constant 0 : index
    %c0_4 = arith.constant 0 : index
    %c0_5 = arith.constant 0 : index
    %4 = vector.load %arg3[%c0_3, %c0_4, %c0_5] : memref<9x1x256xf32, #tpu.memory_space<vmem>>, vector<1x1x256xf32>
    %5 = vector.shape_cast %4 : vector<1x1x256xf32> to vector<1x256xf32>
    %6 = arith.mulf %3, %5 : vector<1x256xf32>
    %c0_6 = arith.constant 0 : index
    %c0_7 = arith.constant 0 : index
    %c0_8 = arith.constant 0 : index
    %7 = vector.load %arg1[%c0_6, %c0_7, %c0_8] : memref<36x8x1xf32, #tpu.memory_space<vmem>>, vector<1x8x1xf32>
    %8 = vector.shape_cast %7 : vector<1x8x1xf32> to vector<8x1xf32>
    %9 = vector.broadcast %8 : vector<8x1xf32> to vector<8x256xf32>
    %10 = vector.broadcast %6 : vector<1x256xf32> to vector<8x256xf32>
    %11 = arith.mulf %9, %10 : vector<8x256xf32>
    %12 = arith.addf %0, %11 : vector<8x256xf32>
    %c32_i32 = arith.constant 32 : i32
    %13 = tpu.dynamic_rotate %2 by %c32_i32 dim 1 : vector<1x256xf32>, i32 -> vector<1x256xf32>
    %c1 = arith.constant 1 : index
    %c0_9 = arith.constant 0 : index
    %c0_10 = arith.constant 0 : index
    %14 = vector.load %arg3[%c1, %c0_9, %c0_10] : memref<9x1x256xf32, #tpu.memory_space<vmem>>, vector<1x1x256xf32>
    %15 = vector.shape_cast %14 : vector<1x1x256xf32> to vector<1x256xf32>
    %16 = arith.mulf %13, %15 : vector<1x256xf32>
    %c1_11 = arith.constant 1 : index
    %c0_12 = arith.constant 0 : index
    %c0_13 = arith.constant 0 : index
    %17 = vector.load %arg1[%c1_11, %c0_12, %c0_13] : memref<36x8x1xf32, #tpu.memory_space<vmem>>, vector<1x8x1xf32>
    %18 = vector.shape_cast %17 : vector<1x8x1xf32> to vector<8x1xf32>
    %19 = vector.broadcast %18 : vector<8x1xf32> to vector<8x256xf32>
    %20 = vector.broadcast %16 : vector<1x256xf32> to vector<8x256xf32>
    %21 = arith.mulf %19, %20 : vector<8x256xf32>
    %22 = arith.addf %12, %21 : vector<8x256xf32>
    %c30_i32 = arith.constant 30 : i32
    %23 = tpu.dynamic_rotate %2 by %c30_i32 dim 1 : vector<1x256xf32>, i32 -> vector<1x256xf32>
    %c2 = arith.constant 2 : index
    %c0_14 = arith.constant 0 : index
    %c0_15 = arith.constant 0 : index
    %24 = vector.load %arg3[%c2, %c0_14, %c0_15] : memref<9x1x256xf32, #tpu.memory_space<vmem>>, vector<1x1x256xf32>
    %25 = vector.shape_cast %24 : vector<1x1x256xf32> to vector<1x256xf32>
    %26 = arith.mulf %23, %25 : vector<1x256xf32>
    %c2_16 = arith.constant 2 : index
    %c0_17 = arith.constant 0 : index
    %c0_18 = arith.constant 0 : index
    %27 = vector.load %arg1[%c2_16, %c0_17, %c0_18] : memref<36x8x1xf32, #tpu.memory_space<vmem>>, vector<1x8x1xf32>
    %28 = vector.shape_cast %27 : vector<1x8x1xf32> to vector<8x1xf32>
    %29 = vector.broadcast %28 : vector<8x1xf32> to vector<8x256xf32>
    %30 = vector.broadcast %26 : vector<1x256xf32> to vector<8x256xf32>
    %31 = arith.mulf %29, %30 : vector<8x256xf32>
    %32 = arith.addf %22, %31 : vector<8x256xf32>
    %c2_i32 = arith.constant 2 : i32
    %33 = tpu.dynamic_rotate %2 by %c2_i32 dim 1 : vector<1x256xf32>, i32 -> vector<1x256xf32>
    %c3 = arith.constant 3 : index
    %c0_19 = arith.constant 0 : index
    %c0_20 = arith.constant 0 : index
    %34 = vector.load %arg3[%c3, %c0_19, %c0_20] : memref<9x1x256xf32, #tpu.memory_space<vmem>>, vector<1x1x256xf32>
    %35 = vector.shape_cast %34 : vector<1x1x256xf32> to vector<1x256xf32>
    %36 = arith.mulf %33, %35 : vector<1x256xf32>
    %c3_21 = arith.constant 3 : index
    %c0_22 = arith.constant 0 : index
    %c0_23 = arith.constant 0 : index
    %37 = vector.load %arg1[%c3_21, %c0_22, %c0_23] : memref<36x8x1xf32, #tpu.memory_space<vmem>>, vector<1x8x1xf32>
    %38 = vector.shape_cast %37 : vector<1x8x1xf32> to vector<8x1xf32>
    %39 = vector.broadcast %38 : vector<8x1xf32> to vector<8x256xf32>
    %40 = vector.broadcast %36 : vector<1x256xf32> to vector<8x256xf32>
    %41 = arith.mulf %39, %40 : vector<8x256xf32>
    %42 = arith.addf %32, %41 : vector<8x256xf32>
    %c4 = arith.constant 4 : index
    %c0_24 = arith.constant 0 : index
    %c0_25 = arith.constant 0 : index
    %43 = vector.load %arg3[%c4, %c0_24, %c0_25] : memref<9x1x256xf32, #tpu.memory_space<vmem>>, vector<1x1x256xf32>
    %44 = vector.shape_cast %43 : vector<1x1x256xf32> to vector<1x256xf32>
    %45 = arith.mulf %2, %44 : vector<1x256xf32>
    %c4_26 = arith.constant 4 : index
    %c0_27 = arith.constant 0 : index
    %c0_28 = arith.constant 0 : index
    %46 = vector.load %arg1[%c4_26, %c0_27, %c0_28] : memref<36x8x1xf32, #tpu.memory_space<vmem>>, vector<1x8x1xf32>
    %47 = vector.shape_cast %46 : vector<1x8x1xf32> to vector<8x1xf32>
    %48 = vector.broadcast %47 : vector<8x1xf32> to vector<8x256xf32>
    %49 = vector.broadcast %45 : vector<1x256xf32> to vector<8x256xf32>
    %50 = arith.mulf %48, %49 : vector<8x256xf32>
    %51 = arith.addf %42, %50 : vector<8x256xf32>
    %c254_i32 = arith.constant 254 : i32
    %52 = tpu.dynamic_rotate %2 by %c254_i32 dim 1 : vector<1x256xf32>, i32 -> vector<1x256xf32>
    %c5 = arith.constant 5 : index
    %c0_29 = arith.constant 0 : index
    %c0_30 = arith.constant 0 : index
    %53 = vector.load %arg3[%c5, %c0_29, %c0_30] : memref<9x1x256xf32, #tpu.memory_space<vmem>>, vector<1x1x256xf32>
    %54 = vector.shape_cast %53 : vector<1x1x256xf32> to vector<1x256xf32>
    %55 = arith.mulf %52, %54 : vector<1x256xf32>
    %c5_31 = arith.constant 5 : index
    %c0_32 = arith.constant 0 : index
    %c0_33 = arith.constant 0 : index
    %56 = vector.load %arg1[%c5_31, %c0_32, %c0_33] : memref<36x8x1xf32, #tpu.memory_space<vmem>>, vector<1x8x1xf32>
    %57 = vector.shape_cast %56 : vector<1x8x1xf32> to vector<8x1xf32>
    %58 = vector.broadcast %57 : vector<8x1xf32> to vector<8x256xf32>
    %59 = vector.broadcast %55 : vector<1x256xf32> to vector<8x256xf32>
    %60 = arith.mulf %58, %59 : vector<8x256xf32>
    %61 = arith.addf %51, %60 : vector<8x256xf32>
    %c226_i32 = arith.constant 226 : i32
    %62 = tpu.dynamic_rotate %2 by %c226_i32 dim 1 : vector<1x256xf32>, i32 -> vector<1x256xf32>
    %c6 = arith.constant 6 : index
    %c0_34 = arith.constant 0 : index
    %c0_35 = arith.constant 0 : index
    %63 = vector.load %arg3[%c6, %c0_34, %c0_35] : memref<9x1x256xf32, #tpu.memory_space<vmem>>, vector<1x1x256xf32>
    %64 = vector.shape_cast %63 : vector<1x1x256xf32> to vector<1x256xf32>
    %65 = arith.mulf %62, %64 : vector<1x256xf32>
    %c6_36 = arith.constant 6 : index
    %c0_37 = arith.constant 0 : index
    %c0_38 = arith.constant 0 : index
    %66 = vector.load %arg1[%c6_36, %c0_37, %c0_38] : memref<36x8x1xf32, #tpu.memory_space<vmem>>, vector<1x8x1xf32>
    %67 = vector.shape_cast %66 : vector<1x8x1xf32> to vector<8x1xf32>
    %68 = vector.broadcast %67 : vector<8x1xf32> to vector<8x256xf32>
    %69 = vector.broadcast %65 : vector<1x256xf32> to vector<8x256xf32>
    %70 = arith.mulf %68, %69 : vector<8x256xf32>
    %71 = arith.addf %61, %70 : vector<8x256xf32>
    %c224_i32 = arith.constant 224 : i32
    %72 = tpu.dynamic_rotate %2 by %c224_i32 dim 1 : vector<1x256xf32>, i32 -> vector<1x256xf32>
    %c7 = arith.constant 7 : index
    %c0_39 = arith.constant 0 : index
    %c0_40 = arith.constant 0 : index
    %73 = vector.load %arg3[%c7, %c0_39, %c0_40] : memref<9x1x256xf32, #tpu.memory_space<vmem>>, vector<1x1x256xf32>
    %74 = vector.shape_cast %73 : vector<1x1x256xf32> to vector<1x256xf32>
    %75 = arith.mulf %72, %74 : vector<1x256xf32>
    %c7_41 = arith.constant 7 : index
    %c0_42 = arith.constant 0 : index
    %c0_43 = arith.constant 0 : index
    %76 = vector.load %arg1[%c7_41, %c0_42, %c0_43] : memref<36x8x1xf32, #tpu.memory_space<vmem>>, vector<1x8x1xf32>
    %77 = vector.shape_cast %76 : vector<1x8x1xf32> to vector<8x1xf32>
    %78 = vector.broadcast %77 : vector<8x1xf32> to vector<8x256xf32>
    %79 = vector.broadcast %75 : vector<1x256xf32> to vector<8x256xf32>
    %80 = arith.mulf %78, %79 : vector<8x256xf32>
    %81 = arith.addf %71, %80 : vector<8x256xf32>
    %c222_i32 = arith.constant 222 : i32
    %82 = tpu.dynamic_rotate %2 by %c222_i32 dim 1 : vector<1x256xf32>, i32 -> vector<1x256xf32>
    %c8 = arith.constant 8 : index
    %c0_44 = arith.constant 0 : index
    %c0_45 = arith.constant 0 : index
    %83 = vector.load %arg3[%c8, %c0_44, %c0_45] : memref<9x1x256xf32, #tpu.memory_space<vmem>>, vector<1x1x256xf32>
    %84 = vector.shape_cast %83 : vector<1x1x256xf32> to vector<1x256xf32>
    %85 = arith.mulf %82, %84 : vector<1x256xf32>
    %c8_46 = arith.constant 8 : index
    %c0_47 = arith.constant 0 : index
    %c0_48 = arith.constant 0 : index
    %86 = vector.load %arg1[%c8_46, %c0_47, %c0_48] : memref<36x8x1xf32, #tpu.memory_space<vmem>>, vector<1x8x1xf32>
    %87 = vector.shape_cast %86 : vector<1x8x1xf32> to vector<8x1xf32>
    %88 = vector.broadcast %87 : vector<8x1xf32> to vector<8x256xf32>
    %89 = vector.broadcast %85 : vector<1x256xf32> to vector<8x256xf32>
    %90 = arith.mulf %88, %89 : vector<8x256xf32>
    %91 = arith.addf %81, %90 : vector<8x256xf32>
    %c0_49 = arith.constant 0 : index
    %c1_50 = arith.constant 1 : index
    %c0_51 = arith.constant 0 : index
    %c0_52 = arith.constant 0 : index
    %92 = vector.load %arg4[%c0_49, %c1_50, %c0_51, %c0_52] : memref<1x4x1x256xf32, #tpu.memory_space<vmem>>, vector<1x1x1x256xf32>
    %93 = vector.shape_cast %92 : vector<1x1x1x256xf32> to vector<1x256xf32>
    %c34_i32_53 = arith.constant 34 : i32
    %94 = tpu.dynamic_rotate %93 by %c34_i32_53 dim 1 : vector<1x256xf32>, i32 -> vector<1x256xf32>
    %c0_54 = arith.constant 0 : index
    %c0_55 = arith.constant 0 : index
    %c0_56 = arith.constant 0 : index
    %95 = vector.load %arg3[%c0_54, %c0_55, %c0_56] : memref<9x1x256xf32, #tpu.memory_space<vmem>>, vector<1x1x256xf32>
    %96 = vector.shape_cast %95 : vector<1x1x256xf32> to vector<1x256xf32>
    %97 = arith.mulf %94, %96 : vector<1x256xf32>
    %c9 = arith.constant 9 : index
    %c0_57 = arith.constant 0 : index
    %c0_58 = arith.constant 0 : index
    %98 = vector.load %arg1[%c9, %c0_57, %c0_58] : memref<36x8x1xf32, #tpu.memory_space<vmem>>, vector<1x8x1xf32>
    %99 = vector.shape_cast %98 : vector<1x8x1xf32> to vector<8x1xf32>
    %100 = vector.broadcast %99 : vector<8x1xf32> to vector<8x256xf32>
    %101 = vector.broadcast %97 : vector<1x256xf32> to vector<8x256xf32>
    %102 = arith.mulf %100, %101 : vector<8x256xf32>
    %103 = arith.addf %91, %102 : vector<8x256xf32>
    %c32_i32_59 = arith.constant 32 : i32
    %104 = tpu.dynamic_rotate %93 by %c32_i32_59 dim 1 : vector<1x256xf32>, i32 -> vector<1x256xf32>
    %c1_60 = arith.constant 1 : index
    %c0_61 = arith.constant 0 : index
    %c0_62 = arith.constant 0 : index
    %105 = vector.load %arg3[%c1_60, %c0_61, %c0_62] : memref<9x1x256xf32, #tpu.memory_space<vmem>>, vector<1x1x256xf32>
    %106 = vector.shape_cast %105 : vector<1x1x256xf32> to vector<1x256xf32>
    %107 = arith.mulf %104, %106 : vector<1x256xf32>
    %c10 = arith.constant 10 : index
    %c0_63 = arith.constant 0 : index
    %c0_64 = arith.constant 0 : index
    %108 = vector.load %arg1[%c10, %c0_63, %c0_64] : memref<36x8x1xf32, #tpu.memory_space<vmem>>, vector<1x8x1xf32>
    %109 = vector.shape_cast %108 : vector<1x8x1xf32> to vector<8x1xf32>
    %110 = vector.broadcast %109 : vector<8x1xf32> to vector<8x256xf32>
    %111 = vector.broadcast %107 : vector<1x256xf32> to vector<8x256xf32>
    %112 = arith.mulf %110, %111 : vector<8x256xf32>
    %113 = arith.addf %103, %112 : vector<8x256xf32>
    %c30_i32_65 = arith.constant 30 : i32
    %114 = tpu.dynamic_rotate %93 by %c30_i32_65 dim 1 : vector<1x256xf32>, i32 -> vector<1x256xf32>
    %c2_66 = arith.constant 2 : index
    %c0_67 = arith.constant 0 : index
    %c0_68 = arith.constant 0 : index
    %115 = vector.load %arg3[%c2_66, %c0_67, %c0_68] : memref<9x1x256xf32, #tpu.memory_space<vmem>>, vector<1x1x256xf32>
    %116 = vector.shape_cast %115 : vector<1x1x256xf32> to vector<1x256xf32>
    %117 = arith.mulf %114, %116 : vector<1x256xf32>
    %c11 = arith.constant 11 : index
    %c0_69 = arith.constant 0 : index
    %c0_70 = arith.constant 0 : index
    %118 = vector.load %arg1[%c11, %c0_69, %c0_70] : memref<36x8x1xf32, #tpu.memory_space<vmem>>, vector<1x8x1xf32>
    %119 = vector.shape_cast %118 : vector<1x8x1xf32> to vector<8x1xf32>
    %120 = vector.broadcast %119 : vector<8x1xf32> to vector<8x256xf32>
    %121 = vector.broadcast %117 : vector<1x256xf32> to vector<8x256xf32>
    %122 = arith.mulf %120, %121 : vector<8x256xf32>
    %123 = arith.addf %113, %122 : vector<8x256xf32>
    %c2_i32_71 = arith.constant 2 : i32
    %124 = tpu.dynamic_rotate %93 by %c2_i32_71 dim 1 : vector<1x256xf32>, i32 -> vector<1x256xf32>
    %c3_72 = arith.constant 3 : index
    %c0_73 = arith.constant 0 : index
    %c0_74 = arith.constant 0 : index
    %125 = vector.load %arg3[%c3_72, %c0_73, %c0_74] : memref<9x1x256xf32, #tpu.memory_space<vmem>>, vector<1x1x256xf32>
    %126 = vector.shape_cast %125 : vector<1x1x256xf32> to vector<1x256xf32>
    %127 = arith.mulf %124, %126 : vector<1x256xf32>
    %c12 = arith.constant 12 : index
    %c0_75 = arith.constant 0 : index
    %c0_76 = arith.constant 0 : index
    %128 = vector.load %arg1[%c12, %c0_75, %c0_76] : memref<36x8x1xf32, #tpu.memory_space<vmem>>, vector<1x8x1xf32>
    %129 = vector.shape_cast %128 : vector<1x8x1xf32> to vector<8x1xf32>
    %130 = vector.broadcast %129 : vector<8x1xf32> to vector<8x256xf32>
    %131 = vector.broadcast %127 : vector<1x256xf32> to vector<8x256xf32>
    %132 = arith.mulf %130, %131 : vector<8x256xf32>
    %133 = arith.addf %123, %132 : vector<8x256xf32>
    %c4_77 = arith.constant 4 : index
    %c0_78 = arith.constant 0 : index
    %c0_79 = arith.constant 0 : index
    %134 = vector.load %arg3[%c4_77, %c0_78, %c0_79] : memref<9x1x256xf32, #tpu.memory_space<vmem>>, vector<1x1x256xf32>
    %135 = vector.shape_cast %134 : vector<1x1x256xf32> to vector<1x256xf32>
    %136 = arith.mulf %93, %135 : vector<1x256xf32>
    %c13 = arith.constant 13 : index
    %c0_80 = arith.constant 0 : index
    %c0_81 = arith.constant 0 : index
    %137 = vector.load %arg1[%c13, %c0_80, %c0_81] : memref<36x8x1xf32, #tpu.memory_space<vmem>>, vector<1x8x1xf32>
    %138 = vector.shape_cast %137 : vector<1x8x1xf32> to vector<8x1xf32>
    %139 = vector.broadcast %138 : vector<8x1xf32> to vector<8x256xf32>
    %140 = vector.broadcast %136 : vector<1x256xf32> to vector<8x256xf32>
    %141 = arith.mulf %139, %140 : vector<8x256xf32>
    %142 = arith.addf %133, %141 : vector<8x256xf32>
    %c254_i32_82 = arith.constant 254 : i32
    %143 = tpu.dynamic_rotate %93 by %c254_i32_82 dim 1 : vector<1x256xf32>, i32 -> vector<1x256xf32>
    %c5_83 = arith.constant 5 : index
    %c0_84 = arith.constant 0 : index
    %c0_85 = arith.constant 0 : index
    %144 = vector.load %arg3[%c5_83, %c0_84, %c0_85] : memref<9x1x256xf32, #tpu.memory_space<vmem>>, vector<1x1x256xf32>
    %145 = vector.shape_cast %144 : vector<1x1x256xf32> to vector<1x256xf32>
    %146 = arith.mulf %143, %145 : vector<1x256xf32>
    %c14 = arith.constant 14 : index
    %c0_86 = arith.constant 0 : index
    %c0_87 = arith.constant 0 : index
    %147 = vector.load %arg1[%c14, %c0_86, %c0_87] : memref<36x8x1xf32, #tpu.memory_space<vmem>>, vector<1x8x1xf32>
    %148 = vector.shape_cast %147 : vector<1x8x1xf32> to vector<8x1xf32>
    %149 = vector.broadcast %148 : vector<8x1xf32> to vector<8x256xf32>
    %150 = vector.broadcast %146 : vector<1x256xf32> to vector<8x256xf32>
    %151 = arith.mulf %149, %150 : vector<8x256xf32>
    %152 = arith.addf %142, %151 : vector<8x256xf32>
    %c226_i32_88 = arith.constant 226 : i32
    %153 = tpu.dynamic_rotate %93 by %c226_i32_88 dim 1 : vector<1x256xf32>, i32 -> vector<1x256xf32>
    %c6_89 = arith.constant 6 : index
    %c0_90 = arith.constant 0 : index
    %c0_91 = arith.constant 0 : index
    %154 = vector.load %arg3[%c6_89, %c0_90, %c0_91] : memref<9x1x256xf32, #tpu.memory_space<vmem>>, vector<1x1x256xf32>
    %155 = vector.shape_cast %154 : vector<1x1x256xf32> to vector<1x256xf32>
    %156 = arith.mulf %153, %155 : vector<1x256xf32>
    %c15 = arith.constant 15 : index
    %c0_92 = arith.constant 0 : index
    %c0_93 = arith.constant 0 : index
    %157 = vector.load %arg1[%c15, %c0_92, %c0_93] : memref<36x8x1xf32, #tpu.memory_space<vmem>>, vector<1x8x1xf32>
    %158 = vector.shape_cast %157 : vector<1x8x1xf32> to vector<8x1xf32>
    %159 = vector.broadcast %158 : vector<8x1xf32> to vector<8x256xf32>
    %160 = vector.broadcast %156 : vector<1x256xf32> to vector<8x256xf32>
    %161 = arith.mulf %159, %160 : vector<8x256xf32>
    %162 = arith.addf %152, %161 : vector<8x256xf32>
    %c224_i32_94 = arith.constant 224 : i32
    %163 = tpu.dynamic_rotate %93 by %c224_i32_94 dim 1 : vector<1x256xf32>, i32 -> vector<1x256xf32>
    %c7_95 = arith.constant 7 : index
    %c0_96 = arith.constant 0 : index
    %c0_97 = arith.constant 0 : index
    %164 = vector.load %arg3[%c7_95, %c0_96, %c0_97] : memref<9x1x256xf32, #tpu.memory_space<vmem>>, vector<1x1x256xf32>
    %165 = vector.shape_cast %164 : vector<1x1x256xf32> to vector<1x256xf32>
    %166 = arith.mulf %163, %165 : vector<1x256xf32>
    %c16 = arith.constant 16 : index
    %c0_98 = arith.constant 0 : index
    %c0_99 = arith.constant 0 : index
    %167 = vector.load %arg1[%c16, %c0_98, %c0_99] : memref<36x8x1xf32, #tpu.memory_space<vmem>>, vector<1x8x1xf32>
    %168 = vector.shape_cast %167 : vector<1x8x1xf32> to vector<8x1xf32>
    %169 = vector.broadcast %168 : vector<8x1xf32> to vector<8x256xf32>
    %170 = vector.broadcast %166 : vector<1x256xf32> to vector<8x256xf32>
    %171 = arith.mulf %169, %170 : vector<8x256xf32>
    %172 = arith.addf %162, %171 : vector<8x256xf32>
    %c222_i32_100 = arith.constant 222 : i32
    %173 = tpu.dynamic_rotate %93 by %c222_i32_100 dim 1 : vector<1x256xf32>, i32 -> vector<1x256xf32>
    %c8_101 = arith.constant 8 : index
    %c0_102 = arith.constant 0 : index
    %c0_103 = arith.constant 0 : index
    %174 = vector.load %arg3[%c8_101, %c0_102, %c0_103] : memref<9x1x256xf32, #tpu.memory_space<vmem>>, vector<1x1x256xf32>
    %175 = vector.shape_cast %174 : vector<1x1x256xf32> to vector<1x256xf32>
    %176 = arith.mulf %173, %175 : vector<1x256xf32>
    %c17 = arith.constant 17 : index
    %c0_104 = arith.constant 0 : index
    %c0_105 = arith.constant 0 : index
    %177 = vector.load %arg1[%c17, %c0_104, %c0_105] : memref<36x8x1xf32, #tpu.memory_space<vmem>>, vector<1x8x1xf32>
    %178 = vector.shape_cast %177 : vector<1x8x1xf32> to vector<8x1xf32>
    %179 = vector.broadcast %178 : vector<8x1xf32> to vector<8x256xf32>
    %180 = vector.broadcast %176 : vector<1x256xf32> to vector<8x256xf32>
    %181 = arith.mulf %179, %180 : vector<8x256xf32>
    %182 = arith.addf %172, %181 : vector<8x256xf32>
    %c0_106 = arith.constant 0 : index
    %c2_107 = arith.constant 2 : index
    %c0_108 = arith.constant 0 : index
    %c0_109 = arith.constant 0 : index
    %183 = vector.load %arg4[%c0_106, %c2_107, %c0_108, %c0_109] : memref<1x4x1x256xf32, #tpu.memory_space<vmem>>, vector<1x1x1x256xf32>
    %184 = vector.shape_cast %183 : vector<1x1x1x256xf32> to vector<1x256xf32>
    %c34_i32_110 = arith.constant 34 : i32
    %185 = tpu.dynamic_rotate %184 by %c34_i32_110 dim 1 : vector<1x256xf32>, i32 -> vector<1x256xf32>
    %c0_111 = arith.constant 0 : index
    %c0_112 = arith.constant 0 : index
    %c0_113 = arith.constant 0 : index
    %186 = vector.load %arg3[%c0_111, %c0_112, %c0_113] : memref<9x1x256xf32, #tpu.memory_space<vmem>>, vector<1x1x256xf32>
    %187 = vector.shape_cast %186 : vector<1x1x256xf32> to vector<1x256xf32>
    %188 = arith.mulf %185, %187 : vector<1x256xf32>
    %c18 = arith.constant 18 : index
    %c0_114 = arith.constant 0 : index
    %c0_115 = arith.constant 0 : index
    %189 = vector.load %arg1[%c18, %c0_114, %c0_115] : memref<36x8x1xf32, #tpu.memory_space<vmem>>, vector<1x8x1xf32>
    %190 = vector.shape_cast %189 : vector<1x8x1xf32> to vector<8x1xf32>
    %191 = vector.broadcast %190 : vector<8x1xf32> to vector<8x256xf32>
    %192 = vector.broadcast %188 : vector<1x256xf32> to vector<8x256xf32>
    %193 = arith.mulf %191, %192 : vector<8x256xf32>
    %194 = arith.addf %182, %193 : vector<8x256xf32>
    %c32_i32_116 = arith.constant 32 : i32
    %195 = tpu.dynamic_rotate %184 by %c32_i32_116 dim 1 : vector<1x256xf32>, i32 -> vector<1x256xf32>
    %c1_117 = arith.constant 1 : index
    %c0_118 = arith.constant 0 : index
    %c0_119 = arith.constant 0 : index
    %196 = vector.load %arg3[%c1_117, %c0_118, %c0_119] : memref<9x1x256xf32, #tpu.memory_space<vmem>>, vector<1x1x256xf32>
    %197 = vector.shape_cast %196 : vector<1x1x256xf32> to vector<1x256xf32>
    %198 = arith.mulf %195, %197 : vector<1x256xf32>
    %c19 = arith.constant 19 : index
    %c0_120 = arith.constant 0 : index
    %c0_121 = arith.constant 0 : index
    %199 = vector.load %arg1[%c19, %c0_120, %c0_121] : memref<36x8x1xf32, #tpu.memory_space<vmem>>, vector<1x8x1xf32>
    %200 = vector.shape_cast %199 : vector<1x8x1xf32> to vector<8x1xf32>
    %201 = vector.broadcast %200 : vector<8x1xf32> to vector<8x256xf32>
    %202 = vector.broadcast %198 : vector<1x256xf32> to vector<8x256xf32>
    %203 = arith.mulf %201, %202 : vector<8x256xf32>
    %204 = arith.addf %194, %203 : vector<8x256xf32>
    %c30_i32_122 = arith.constant 30 : i32
    %205 = tpu.dynamic_rotate %184 by %c30_i32_122 dim 1 : vector<1x256xf32>, i32 -> vector<1x256xf32>
    %c2_123 = arith.constant 2 : index
    %c0_124 = arith.constant 0 : index
    %c0_125 = arith.constant 0 : index
    %206 = vector.load %arg3[%c2_123, %c0_124, %c0_125] : memref<9x1x256xf32, #tpu.memory_space<vmem>>, vector<1x1x256xf32>
    %207 = vector.shape_cast %206 : vector<1x1x256xf32> to vector<1x256xf32>
    %208 = arith.mulf %205, %207 : vector<1x256xf32>
    %c20 = arith.constant 20 : index
    %c0_126 = arith.constant 0 : index
    %c0_127 = arith.constant 0 : index
    %209 = vector.load %arg1[%c20, %c0_126, %c0_127] : memref<36x8x1xf32, #tpu.memory_space<vmem>>, vector<1x8x1xf32>
    %210 = vector.shape_cast %209 : vector<1x8x1xf32> to vector<8x1xf32>
    %211 = vector.broadcast %210 : vector<8x1xf32> to vector<8x256xf32>
    %212 = vector.broadcast %208 : vector<1x256xf32> to vector<8x256xf32>
    %213 = arith.mulf %211, %212 : vector<8x256xf32>
    %214 = arith.addf %204, %213 : vector<8x256xf32>
    %c2_i32_128 = arith.constant 2 : i32
    %215 = tpu.dynamic_rotate %184 by %c2_i32_128 dim 1 : vector<1x256xf32>, i32 -> vector<1x256xf32>
    %c3_129 = arith.constant 3 : index
    %c0_130 = arith.constant 0 : index
    %c0_131 = arith.constant 0 : index
    %216 = vector.load %arg3[%c3_129, %c0_130, %c0_131] : memref<9x1x256xf32, #tpu.memory_space<vmem>>, vector<1x1x256xf32>
    %217 = vector.shape_cast %216 : vector<1x1x256xf32> to vector<1x256xf32>
    %218 = arith.mulf %215, %217 : vector<1x256xf32>
    %c21 = arith.constant 21 : index
    %c0_132 = arith.constant 0 : index
    %c0_133 = arith.constant 0 : index
    %219 = vector.load %arg1[%c21, %c0_132, %c0_133] : memref<36x8x1xf32, #tpu.memory_space<vmem>>, vector<1x8x1xf32>
    %220 = vector.shape_cast %219 : vector<1x8x1xf32> to vector<8x1xf32>
    %221 = vector.broadcast %220 : vector<8x1xf32> to vector<8x256xf32>
    %222 = vector.broadcast %218 : vector<1x256xf32> to vector<8x256xf32>
    %223 = arith.mulf %221, %222 : vector<8x256xf32>
    %224 = arith.addf %214, %223 : vector<8x256xf32>
    %c4_134 = arith.constant 4 : index
    %c0_135 = arith.constant 0 : index
    %c0_136 = arith.constant 0 : index
    %225 = vector.load %arg3[%c4_134, %c0_135, %c0_136] : memref<9x1x256xf32, #tpu.memory_space<vmem>>, vector<1x1x256xf32>
    %226 = vector.shape_cast %225 : vector<1x1x256xf32> to vector<1x256xf32>
    %227 = arith.mulf %184, %226 : vector<1x256xf32>
    %c22 = arith.constant 22 : index
    %c0_137 = arith.constant 0 : index
    %c0_138 = arith.constant 0 : index
    %228 = vector.load %arg1[%c22, %c0_137, %c0_138] : memref<36x8x1xf32, #tpu.memory_space<vmem>>, vector<1x8x1xf32>
    %229 = vector.shape_cast %228 : vector<1x8x1xf32> to vector<8x1xf32>
    %230 = vector.broadcast %229 : vector<8x1xf32> to vector<8x256xf32>
    %231 = vector.broadcast %227 : vector<1x256xf32> to vector<8x256xf32>
    %232 = arith.mulf %230, %231 : vector<8x256xf32>
    %233 = arith.addf %224, %232 : vector<8x256xf32>
    %c254_i32_139 = arith.constant 254 : i32
    %234 = tpu.dynamic_rotate %184 by %c254_i32_139 dim 1 : vector<1x256xf32>, i32 -> vector<1x256xf32>
    %c5_140 = arith.constant 5 : index
    %c0_141 = arith.constant 0 : index
    %c0_142 = arith.constant 0 : index
    %235 = vector.load %arg3[%c5_140, %c0_141, %c0_142] : memref<9x1x256xf32, #tpu.memory_space<vmem>>, vector<1x1x256xf32>
    %236 = vector.shape_cast %235 : vector<1x1x256xf32> to vector<1x256xf32>
    %237 = arith.mulf %234, %236 : vector<1x256xf32>
    %c23 = arith.constant 23 : index
    %c0_143 = arith.constant 0 : index
    %c0_144 = arith.constant 0 : index
    %238 = vector.load %arg1[%c23, %c0_143, %c0_144] : memref<36x8x1xf32, #tpu.memory_space<vmem>>, vector<1x8x1xf32>
    %239 = vector.shape_cast %238 : vector<1x8x1xf32> to vector<8x1xf32>
    %240 = vector.broadcast %239 : vector<8x1xf32> to vector<8x256xf32>
    %241 = vector.broadcast %237 : vector<1x256xf32> to vector<8x256xf32>
    %242 = arith.mulf %240, %241 : vector<8x256xf32>
    %243 = arith.addf %233, %242 : vector<8x256xf32>
    %c226_i32_145 = arith.constant 226 : i32
    %244 = tpu.dynamic_rotate %184 by %c226_i32_145 dim 1 : vector<1x256xf32>, i32 -> vector<1x256xf32>
    %c6_146 = arith.constant 6 : index
    %c0_147 = arith.constant 0 : index
    %c0_148 = arith.constant 0 : index
    %245 = vector.load %arg3[%c6_146, %c0_147, %c0_148] : memref<9x1x256xf32, #tpu.memory_space<vmem>>, vector<1x1x256xf32>
    %246 = vector.shape_cast %245 : vector<1x1x256xf32> to vector<1x256xf32>
    %247 = arith.mulf %244, %246 : vector<1x256xf32>
    %c24 = arith.constant 24 : index
    %c0_149 = arith.constant 0 : index
    %c0_150 = arith.constant 0 : index
    %248 = vector.load %arg1[%c24, %c0_149, %c0_150] : memref<36x8x1xf32, #tpu.memory_space<vmem>>, vector<1x8x1xf32>
    %249 = vector.shape_cast %248 : vector<1x8x1xf32> to vector<8x1xf32>
    %250 = vector.broadcast %249 : vector<8x1xf32> to vector<8x256xf32>
    %251 = vector.broadcast %247 : vector<1x256xf32> to vector<8x256xf32>
    %252 = arith.mulf %250, %251 : vector<8x256xf32>
    %253 = arith.addf %243, %252 : vector<8x256xf32>
    %c224_i32_151 = arith.constant 224 : i32
    %254 = tpu.dynamic_rotate %184 by %c224_i32_151 dim 1 : vector<1x256xf32>, i32 -> vector<1x256xf32>
    %c7_152 = arith.constant 7 : index
    %c0_153 = arith.constant 0 : index
    %c0_154 = arith.constant 0 : index
    %255 = vector.load %arg3[%c7_152, %c0_153, %c0_154] : memref<9x1x256xf32, #tpu.memory_space<vmem>>, vector<1x1x256xf32>
    %256 = vector.shape_cast %255 : vector<1x1x256xf32> to vector<1x256xf32>
    %257 = arith.mulf %254, %256 : vector<1x256xf32>
    %c25 = arith.constant 25 : index
    %c0_155 = arith.constant 0 : index
    %c0_156 = arith.constant 0 : index
    %258 = vector.load %arg1[%c25, %c0_155, %c0_156] : memref<36x8x1xf32, #tpu.memory_space<vmem>>, vector<1x8x1xf32>
    %259 = vector.shape_cast %258 : vector<1x8x1xf32> to vector<8x1xf32>
    %260 = vector.broadcast %259 : vector<8x1xf32> to vector<8x256xf32>
    %261 = vector.broadcast %257 : vector<1x256xf32> to vector<8x256xf32>
    %262 = arith.mulf %260, %261 : vector<8x256xf32>
    %263 = arith.addf %253, %262 : vector<8x256xf32>
    %c222_i32_157 = arith.constant 222 : i32
    %264 = tpu.dynamic_rotate %184 by %c222_i32_157 dim 1 : vector<1x256xf32>, i32 -> vector<1x256xf32>
    %c8_158 = arith.constant 8 : index
    %c0_159 = arith.constant 0 : index
    %c0_160 = arith.constant 0 : index
    %265 = vector.load %arg3[%c8_158, %c0_159, %c0_160] : memref<9x1x256xf32, #tpu.memory_space<vmem>>, vector<1x1x256xf32>
    %266 = vector.shape_cast %265 : vector<1x1x256xf32> to vector<1x256xf32>
    %267 = arith.mulf %264, %266 : vector<1x256xf32>
    %c26 = arith.constant 26 : index
    %c0_161 = arith.constant 0 : index
    %c0_162 = arith.constant 0 : index
    %268 = vector.load %arg1[%c26, %c0_161, %c0_162] : memref<36x8x1xf32, #tpu.memory_space<vmem>>, vector<1x8x1xf32>
    %269 = vector.shape_cast %268 : vector<1x8x1xf32> to vector<8x1xf32>
    %270 = vector.broadcast %269 : vector<8x1xf32> to vector<8x256xf32>
    %271 = vector.broadcast %267 : vector<1x256xf32> to vector<8x256xf32>
    %272 = arith.mulf %270, %271 : vector<8x256xf32>
    %273 = arith.addf %263, %272 : vector<8x256xf32>
    %c0_163 = arith.constant 0 : index
    %c3_164 = arith.constant 3 : index
    %c0_165 = arith.constant 0 : index
    %c0_166 = arith.constant 0 : index
    %274 = vector.load %arg4[%c0_163, %c3_164, %c0_165, %c0_166] : memref<1x4x1x256xf32, #tpu.memory_space<vmem>>, vector<1x1x1x256xf32>
    %275 = vector.shape_cast %274 : vector<1x1x1x256xf32> to vector<1x256xf32>
    %c34_i32_167 = arith.constant 34 : i32
    %276 = tpu.dynamic_rotate %275 by %c34_i32_167 dim 1 : vector<1x256xf32>, i32 -> vector<1x256xf32>
    %c0_168 = arith.constant 0 : index
    %c0_169 = arith.constant 0 : index
    %c0_170 = arith.constant 0 : index
    %277 = vector.load %arg3[%c0_168, %c0_169, %c0_170] : memref<9x1x256xf32, #tpu.memory_space<vmem>>, vector<1x1x256xf32>
    %278 = vector.shape_cast %277 : vector<1x1x256xf32> to vector<1x256xf32>
    %279 = arith.mulf %276, %278 : vector<1x256xf32>
    %c27 = arith.constant 27 : index
    %c0_171 = arith.constant 0 : index
    %c0_172 = arith.constant 0 : index
    %280 = vector.load %arg1[%c27, %c0_171, %c0_172] : memref<36x8x1xf32, #tpu.memory_space<vmem>>, vector<1x8x1xf32>
    %281 = vector.shape_cast %280 : vector<1x8x1xf32> to vector<8x1xf32>
    %282 = vector.broadcast %281 : vector<8x1xf32> to vector<8x256xf32>
    %283 = vector.broadcast %279 : vector<1x256xf32> to vector<8x256xf32>
    %284 = arith.mulf %282, %283 : vector<8x256xf32>
    %285 = arith.addf %273, %284 : vector<8x256xf32>
    %c32_i32_173 = arith.constant 32 : i32
    %286 = tpu.dynamic_rotate %275 by %c32_i32_173 dim 1 : vector<1x256xf32>, i32 -> vector<1x256xf32>
    %c1_174 = arith.constant 1 : index
    %c0_175 = arith.constant 0 : index
    %c0_176 = arith.constant 0 : index
    %287 = vector.load %arg3[%c1_174, %c0_175, %c0_176] : memref<9x1x256xf32, #tpu.memory_space<vmem>>, vector<1x1x256xf32>
    %288 = vector.shape_cast %287 : vector<1x1x256xf32> to vector<1x256xf32>
    %289 = arith.mulf %286, %288 : vector<1x256xf32>
    %c28 = arith.constant 28 : index
    %c0_177 = arith.constant 0 : index
    %c0_178 = arith.constant 0 : index
    %290 = vector.load %arg1[%c28, %c0_177, %c0_178] : memref<36x8x1xf32, #tpu.memory_space<vmem>>, vector<1x8x1xf32>
    %291 = vector.shape_cast %290 : vector<1x8x1xf32> to vector<8x1xf32>
    %292 = vector.broadcast %291 : vector<8x1xf32> to vector<8x256xf32>
    %293 = vector.broadcast %289 : vector<1x256xf32> to vector<8x256xf32>
    %294 = arith.mulf %292, %293 : vector<8x256xf32>
    %295 = arith.addf %285, %294 : vector<8x256xf32>
    %c30_i32_179 = arith.constant 30 : i32
    %296 = tpu.dynamic_rotate %275 by %c30_i32_179 dim 1 : vector<1x256xf32>, i32 -> vector<1x256xf32>
    %c2_180 = arith.constant 2 : index
    %c0_181 = arith.constant 0 : index
    %c0_182 = arith.constant 0 : index
    %297 = vector.load %arg3[%c2_180, %c0_181, %c0_182] : memref<9x1x256xf32, #tpu.memory_space<vmem>>, vector<1x1x256xf32>
    %298 = vector.shape_cast %297 : vector<1x1x256xf32> to vector<1x256xf32>
    %299 = arith.mulf %296, %298 : vector<1x256xf32>
    %c29 = arith.constant 29 : index
    %c0_183 = arith.constant 0 : index
    %c0_184 = arith.constant 0 : index
    %300 = vector.load %arg1[%c29, %c0_183, %c0_184] : memref<36x8x1xf32, #tpu.memory_space<vmem>>, vector<1x8x1xf32>
    %301 = vector.shape_cast %300 : vector<1x8x1xf32> to vector<8x1xf32>
    %302 = vector.broadcast %301 : vector<8x1xf32> to vector<8x256xf32>
    %303 = vector.broadcast %299 : vector<1x256xf32> to vector<8x256xf32>
    %304 = arith.mulf %302, %303 : vector<8x256xf32>
    %305 = arith.addf %295, %304 : vector<8x256xf32>
    %c2_i32_185 = arith.constant 2 : i32
    %306 = tpu.dynamic_rotate %275 by %c2_i32_185 dim 1 : vector<1x256xf32>, i32 -> vector<1x256xf32>
    %c3_186 = arith.constant 3 : index
    %c0_187 = arith.constant 0 : index
    %c0_188 = arith.constant 0 : index
    %307 = vector.load %arg3[%c3_186, %c0_187, %c0_188] : memref<9x1x256xf32, #tpu.memory_space<vmem>>, vector<1x1x256xf32>
    %308 = vector.shape_cast %307 : vector<1x1x256xf32> to vector<1x256xf32>
    %309 = arith.mulf %306, %308 : vector<1x256xf32>
    %c30 = arith.constant 30 : index
    %c0_189 = arith.constant 0 : index
    %c0_190 = arith.constant 0 : index
    %310 = vector.load %arg1[%c30, %c0_189, %c0_190] : memref<36x8x1xf32, #tpu.memory_space<vmem>>, vector<1x8x1xf32>
    %311 = vector.shape_cast %310 : vector<1x8x1xf32> to vector<8x1xf32>
    %312 = vector.broadcast %311 : vector<8x1xf32> to vector<8x256xf32>
    %313 = vector.broadcast %309 : vector<1x256xf32> to vector<8x256xf32>
    %314 = arith.mulf %312, %313 : vector<8x256xf32>
    %315 = arith.addf %305, %314 : vector<8x256xf32>
    %c4_191 = arith.constant 4 : index
    %c0_192 = arith.constant 0 : index
    %c0_193 = arith.constant 0 : index
    %316 = vector.load %arg3[%c4_191, %c0_192, %c0_193] : memref<9x1x256xf32, #tpu.memory_space<vmem>>, vector<1x1x256xf32>
    %317 = vector.shape_cast %316 : vector<1x1x256xf32> to vector<1x256xf32>
    %318 = arith.mulf %275, %317 : vector<1x256xf32>
    %c31 = arith.constant 31 : index
    %c0_194 = arith.constant 0 : index
    %c0_195 = arith.constant 0 : index
    %319 = vector.load %arg1[%c31, %c0_194, %c0_195] : memref<36x8x1xf32, #tpu.memory_space<vmem>>, vector<1x8x1xf32>
    %320 = vector.shape_cast %319 : vector<1x8x1xf32> to vector<8x1xf32>
    %321 = vector.broadcast %320 : vector<8x1xf32> to vector<8x256xf32>
    %322 = vector.broadcast %318 : vector<1x256xf32> to vector<8x256xf32>
    %323 = arith.mulf %321, %322 : vector<8x256xf32>
    %324 = arith.addf %315, %323 : vector<8x256xf32>
    %c254_i32_196 = arith.constant 254 : i32
    %325 = tpu.dynamic_rotate %275 by %c254_i32_196 dim 1 : vector<1x256xf32>, i32 -> vector<1x256xf32>
    %c5_197 = arith.constant 5 : index
    %c0_198 = arith.constant 0 : index
    %c0_199 = arith.constant 0 : index
    %326 = vector.load %arg3[%c5_197, %c0_198, %c0_199] : memref<9x1x256xf32, #tpu.memory_space<vmem>>, vector<1x1x256xf32>
    %327 = vector.shape_cast %326 : vector<1x1x256xf32> to vector<1x256xf32>
    %328 = arith.mulf %325, %327 : vector<1x256xf32>
    %c32 = arith.constant 32 : index
    %c0_200 = arith.constant 0 : index
    %c0_201 = arith.constant 0 : index
    %329 = vector.load %arg1[%c32, %c0_200, %c0_201] : memref<36x8x1xf32, #tpu.memory_space<vmem>>, vector<1x8x1xf32>
    %330 = vector.shape_cast %329 : vector<1x8x1xf32> to vector<8x1xf32>
    %331 = vector.broadcast %330 : vector<8x1xf32> to vector<8x256xf32>
    %332 = vector.broadcast %328 : vector<1x256xf32> to vector<8x256xf32>
    %333 = arith.mulf %331, %332 : vector<8x256xf32>
    %334 = arith.addf %324, %333 : vector<8x256xf32>
    %c226_i32_202 = arith.constant 226 : i32
    %335 = tpu.dynamic_rotate %275 by %c226_i32_202 dim 1 : vector<1x256xf32>, i32 -> vector<1x256xf32>
    %c6_203 = arith.constant 6 : index
    %c0_204 = arith.constant 0 : index
    %c0_205 = arith.constant 0 : index
    %336 = vector.load %arg3[%c6_203, %c0_204, %c0_205] : memref<9x1x256xf32, #tpu.memory_space<vmem>>, vector<1x1x256xf32>
    %337 = vector.shape_cast %336 : vector<1x1x256xf32> to vector<1x256xf32>
    %338 = arith.mulf %335, %337 : vector<1x256xf32>
    %c33 = arith.constant 33 : index
    %c0_206 = arith.constant 0 : index
    %c0_207 = arith.constant 0 : index
    %339 = vector.load %arg1[%c33, %c0_206, %c0_207] : memref<36x8x1xf32, #tpu.memory_space<vmem>>, vector<1x8x1xf32>
    %340 = vector.shape_cast %339 : vector<1x8x1xf32> to vector<8x1xf32>
    %341 = vector.broadcast %340 : vector<8x1xf32> to vector<8x256xf32>
    %342 = vector.broadcast %338 : vector<1x256xf32> to vector<8x256xf32>
    %343 = arith.mulf %341, %342 : vector<8x256xf32>
    %344 = arith.addf %334, %343 : vector<8x256xf32>
    %c224_i32_208 = arith.constant 224 : i32
    %345 = tpu.dynamic_rotate %275 by %c224_i32_208 dim 1 : vector<1x256xf32>, i32 -> vector<1x256xf32>
    %c7_209 = arith.constant 7 : index
    %c0_210 = arith.constant 0 : index
    %c0_211 = arith.constant 0 : index
    %346 = vector.load %arg3[%c7_209, %c0_210, %c0_211] : memref<9x1x256xf32, #tpu.memory_space<vmem>>, vector<1x1x256xf32>
    %347 = vector.shape_cast %346 : vector<1x1x256xf32> to vector<1x256xf32>
    %348 = arith.mulf %345, %347 : vector<1x256xf32>
    %c34 = arith.constant 34 : index
    %c0_212 = arith.constant 0 : index
    %c0_213 = arith.constant 0 : index
    %349 = vector.load %arg1[%c34, %c0_212, %c0_213] : memref<36x8x1xf32, #tpu.memory_space<vmem>>, vector<1x8x1xf32>
    %350 = vector.shape_cast %349 : vector<1x8x1xf32> to vector<8x1xf32>
    %351 = vector.broadcast %350 : vector<8x1xf32> to vector<8x256xf32>
    %352 = vector.broadcast %348 : vector<1x256xf32> to vector<8x256xf32>
    %353 = arith.mulf %351, %352 : vector<8x256xf32>
    %354 = arith.addf %344, %353 : vector<8x256xf32>
    %c222_i32_214 = arith.constant 222 : i32
    %355 = tpu.dynamic_rotate %275 by %c222_i32_214 dim 1 : vector<1x256xf32>, i32 -> vector<1x256xf32>
    %c8_215 = arith.constant 8 : index
    %c0_216 = arith.constant 0 : index
    %c0_217 = arith.constant 0 : index
    %356 = vector.load %arg3[%c8_215, %c0_216, %c0_217] : memref<9x1x256xf32, #tpu.memory_space<vmem>>, vector<1x1x256xf32>
    %357 = vector.shape_cast %356 : vector<1x1x256xf32> to vector<1x256xf32>
    %358 = arith.mulf %355, %357 : vector<1x256xf32>
    %c35 = arith.constant 35 : index
    %c0_218 = arith.constant 0 : index
    %c0_219 = arith.constant 0 : index
    %359 = vector.load %arg1[%c35, %c0_218, %c0_219] : memref<36x8x1xf32, #tpu.memory_space<vmem>>, vector<1x8x1xf32>
    %360 = vector.shape_cast %359 : vector<1x8x1xf32> to vector<8x1xf32>
    %361 = vector.broadcast %360 : vector<8x1xf32> to vector<8x256xf32>
    %362 = vector.broadcast %358 : vector<1x256xf32> to vector<8x256xf32>
    %363 = arith.mulf %361, %362 : vector<8x256xf32>
    %364 = arith.addf %354, %363 : vector<8x256xf32>
    %c0_220 = arith.constant 0 : index
    %c0_221 = arith.constant 0 : index
    %365 = vector.load %arg2[%c0_220, %c0_221] : memref<8x1xf32, #tpu.memory_space<vmem>>, vector<8x1xf32>
    %366 = vector.broadcast %365 : vector<8x1xf32> to vector<8x256xf32>
    %367 = arith.addf %364, %366 : vector<8x256xf32>
    %cst_222 = arith.constant 0.000000e+00 : f32
    %368 = vector.broadcast %cst_222 : f32 to vector<8x256xf32>
    %369 = arith.maximumf %367, %368 : vector<8x256xf32>
    %c0_223 = arith.constant 0 : index
    %c0_224 = arith.constant 0 : index
    %c0_225 = arith.constant 0 : index
    %370 = vector.load %arg5[%c0_223, %c0_224, %c0_225] : memref<1x8x256xf32, #tpu.memory_space<vmem>>, vector<1x8x256xf32>
    %371 = vector.shape_cast %370 : vector<1x8x256xf32> to vector<8x256xf32>
    %372 = vector.shape_cast %369 : vector<8x256xf32> to vector<1x8x256xf32>
    tpu.vector_store %arg5[%c0_223, %c0_224, %c0_225], %372 {strides = array<i32>} : memref<1x8x256xf32, #tpu.memory_space<vmem>>, vector<1x8x256xf32>,
    return
  }
  func.func @transform_0(%arg0: i32) -> (i32, i32, i32) {
    %c0_i32 = arith.constant 0 : i32
    %c0_i32_0 = arith.constant 0 : i32
    %c0_i32_1 = arith.constant 0 : i32
    %c0_i32_2 = arith.constant 0 : i32
    return %c0_i32, %c0_i32_0, %c0_i32_1 : i32, i32, i32
  }
  func.func @transform_1(%arg0: i32) -> (i32, i32) {
    %c0_i32 = arith.constant 0 : i32
    %c0_i32_0 = arith.constant 0 : i32
    %c0_i32_1 = arith.constant 0 : i32
    return %c0_i32, %c0_i32_0 : i32, i32
  }
  func.func @transform_2(%arg0: i32) -> (i32, i32, i32) {
    %c0_i32 = arith.constant 0 : i32
    %c0_i32_0 = arith.constant 0 : i32
    %c0_i32_1 = arith.constant 0 : i32
    %c0_i32_2 = arith.constant 0 : i32
    return %c0_i32, %c0_i32_0, %c0_i32_1 : i32, i32, i32
  }
  func.func @transform_3(%arg0: i32) -> (i32, i32, i32, i32) {
    %c0_i32 = arith.constant 0 : i32
    %c0_i32_0 = arith.constant 0 : i32
    %c0_i32_1 = arith.constant 0 : i32
    %c0_i32_2 = arith.constant 0 : i32
    return %arg0, %c0_i32, %c0_i32_0, %c0_i32_1 : i32, i32, i32, i32
  }
  func.func @transform_4(%arg0: i32) -> (i32, i32, i32) {
    %c0_i32 = arith.constant 0 : i32
    %c0_i32_0 = arith.constant 0 : i32
    %c0_i32_1 = arith.constant 0 : i32
    return %arg0, %c0_i32, %c0_i32_0 : i32, i32, i32
  }
}

</mosaic_0001>

<llo_original>
// kernel: tpu_custom_call.1
$region0: #{tpu_custom_call.1}
  #allocation0 [shape = 'u32[]', space=smem, size = 0x4, offset = 0x4, fixed_abs, tag = 'smem constant byte address 0x4 - core index']
  #allocation1 [shape = 'u32[144,128]{1,0:T(1,128)}', space=vmem, size = 0x12000, scoped, tag = 'internal scratch']
  %s0 = inlined_call_operand.vmem [shape: f32[36,8,1], index: 0, kind: input, shape index: {}]
  %s1 = inlined_call_operand.vmem [shape: f32[8,1], index: 1, kind: input, shape index: {}]
  %s2 = inlined_call_operand.vmem [shape: f32[9,1,256], index: 2, kind: input, shape index: {}]
  %s3 = inlined_call_operand.vmem [shape: f32[2,4,1,256], index: 3, kind: input, shape index: {}]
  %s4 = inlined_call_operand.hbm [shape: f32[2,8,256], index: 4, kind: output, shape index: {}]
  %s5 = sld [smem:[#allocation0]]
  $region49: #{tpu_custom_call.1} parent=0
    _
  %s7 = ssub.s32 1, %s5
  %s8 = scalar_select 0, %s7, %s5
  $region1: #{tpu_custom_call.1} parent=0
    #allocation2 [shape = 'u8[16384]{0}', space=vmem, size = 0x4000, scoped, tag = 'output window, operand 0']
    #allocation3 [shape = 's32[2]{0}', space=sflag, size = 0x8, scoped, tag = 'scoped memory for tpu_custom_call.1']
    %9 = vsyncpa [#allocation3], 0
    %s10 = scalar_lea.sflag [#allocation3], 1
    %11 = vsyncpa %s10, 0
    loop: start=0, step=1, limit=4
    $region2: #{tpu_custom_call.1} parent=1 // loop_pre_header
      _
    $region3: #{tpu_custom_call.1} parent=1 // loop_header
      %s13 = sphi 0, %s17
      %p14 = scmp.ge.s32.totalorder %s13, 4
      %s21 = sphi 0, %s21
      %s23 = sphi 0, %s21
      %s24 = sphi 0, %s23
      %s38 = sphi 0, %s24
      %s42 = sphi 0, %s42
      %s44 = sphi 0, %s42
      %s45 = sphi 0, %s44
      %s59 = sphi 0, %s45
      %s63 = sphi 0, %s63
      %s65 = sphi 0, %s63
      %s66 = sphi 0, %s65
      %s80 = sphi 0, %s66
      %s86 = sphi 0, %s88
      %s89 = sphi 0, %s86
      %s90 = sphi 0, %s89
      %s106 = sphi 0, %s90
      %s112 = sphi 0, %s114
      %s115 = sphi 0, %s112
      %s116 = sphi 0, %s115
      %s132 = sphi 0, %s116
    $region4: #{tpu_custom_call.1} parent=1 // loop_header_branch
      %16 = sbr.rel (%p14) target = $region8
    $region5: #{tpu_custom_call.1} parent=1 // loop_body
      %s18 = ssub.s32 %s13, 1
      %s19 = ssub.s32 %s13, 2
      %s20 = sadd.s32 %s13, 1
      %s22 = sadd.s32 %s21, 1
      %p25 = scmp.eq.s32.totalorder %s13, 1
      %p26 = scmp.ne.s32.totalorder %s21, %s23
      %p27 = scmp.eq.s32.totalorder %s13, 0
      %p28 = por %p26, %p27
      %p29 = scmp.ne.s32.totalorder %s21, %s23
      %p30 = scmp.eq.s32.totalorder %s18, 1
      %p31 = por %p29, %p30
      %p32 = scmp.ne.s32.totalorder %s23, %s24
      %p33 = scmp.eq.s32.totalorder %s18, 0
      %p34 = por %p32, %p33
      %p35 = scmp.ne.s32.totalorder %s23, %s24
      %p36 = scmp.eq.s32.totalorder %s19, 1
      %p37 = por %p35, %p36
      %p39 = scmp.ne.s32.totalorder %s24, %s38
      %p40 = scmp.eq.s32.totalorder %s19, 0
      %p41 = por %p39, %p40
      %s43 = sadd.s32 %s42, 1
      %p46 = scmp.eq.s32.totalorder %s13, 1
      %p47 = scmp.ne.s32.totalorder %s42, %s44
      %p48 = scmp.eq.s32.totalorder %s13, 0
      %p49 = por %p47, %p48
      %p50 = scmp.ne.s32.totalorder %s42, %s44
      %p51 = scmp.eq.s32.totalorder %s18, 1
      %p52 = por %p50, %p51
      %p53 = scmp.ne.s32.totalorder %s44, %s45
      %p54 = scmp.eq.s32.totalorder %s18, 0
      %p55 = por %p53, %p54
      %p56 = scmp.ne.s32.totalorder %s44, %s45
      %p57 = scmp.eq.s32.totalorder %s19, 1
      %p58 = por %p56, %p57
      %p60 = scmp.ne.s32.totalorder %s45, %s59
      %p61 = scmp.eq.s32.totalorder %s19, 0
      %p62 = por %p60, %p61
      %s64 = sadd.s32 %s63, 1
      %p67 = scmp.eq.s32.totalorder %s13, 1
      %p68 = scmp.ne.s32.totalorder %s63, %s65
      %p69 = scmp.eq.s32.totalorder %s13, 0
      %p70 = por %p68, %p69
      %p71 = scmp.ne.s32.totalorder %s63, %s65
      %p72 = scmp.eq.s32.totalorder %s18, 1
      %p73 = por %p71, %p72
      %p74 = scmp.ne.s32.totalorder %s65, %s66
      %p75 = scmp.eq.s32.totalorder %s18, 0
      %p76 = por %p74, %p75
      %p77 = scmp.ne.s32.totalorder %s65, %s66
      %p78 = scmp.eq.s32.totalorder %s19, 1
      %p79 = por %p77, %p78
      %p81 = scmp.ne.s32.totalorder %s66, %s80
      %p82 = scmp.eq.s32.totalorder %s19, 0
      %p83 = por %p81, %p82
      %s84 = ssub.s32 %s13, %s20
      %p85 = scmp.eq.s32.totalorder %s84, 0
      %s87 = sadd.s32 %s86, 1
      %s88 = scalar_select %p85, %s86, %s87
      %p91 = pneg %p85
      %p92 = scmp.eq.s32.totalorder %s13, 1
      %p93 = por %p91, %p92
      %p94 = scmp.ne.s32.totalorder %s86, %s89
      %p95 = scmp.eq.s32.totalorder %s13, 0
      %p96 = por %p94, %p95
      %p97 = scmp.ne.s32.totalorder %s86, %s89
      %p98 = scmp.eq.s32.totalorder %s18, 1
      %p99 = por %p97, %p98
      %p100 = scmp.ne.s32.totalorder %s89, %s90
      %p101 = scmp.eq.s32.totalorder %s18, 0
      %p102 = por %p100, %p101
      %p103 = scmp.ne.s32.totalorder %s89, %s90
      %p104 = scmp.eq.s32.totalorder %s19, 1
      %p105 = por %p103, %p104
      %p107 = scmp.ne.s32.totalorder %s90, %s106
      %p108 = scmp.eq.s32.totalorder %s19, 0
      %p109 = por %p107, %p108
      %s110 = ssub.s32 %s13, %s20
      %p111 = scmp.eq.s32.totalorder %s110, 0
      %s113 = sadd.s32 %s112, 1
      %s114 = scalar_select %p111, %s112, %s113
      %p117 = pneg %p111
      %p118 = scmp.eq.s32.totalorder %s13, 1
      %p119 = por %p117, %p118
      %p120 = scmp.ne.s32.totalorder %s112, %s115
      %p121 = scmp.eq.s32.totalorder %s13, 0
      %p122 = por %p120, %p121
      %p123 = scmp.ne.s32.totalorder %s112, %s115
      %p124 = scmp.eq.s32.totalorder %s18, 1
      %p125 = por %p123, %p124
      %p126 = scmp.ne.s32.totalorder %s115, %s116
      %p127 = scmp.eq.s32.totalorder %s18, 0
      %p128 = por %p126, %p127
      %p129 = scmp.ne.s32.totalorder %s115, %s116
      %p130 = scmp.eq.s32.totalorder %s19, 1
      %p131 = por %p129, %p130
      %p133 = scmp.ne.s32.totalorder %s116, %s132
      %p134 = scmp.eq.s32.totalorder %s19, 0
      %p135 = por %p133, %p134
      %p136 = scmp.le.s32.totalorder 1, %s13
      %p137 = scmp.lt.s32.totalorder %s13, 3
      %p138 = pnand %p136, %p137
      %p139 = pneg %p138
      // Predicated region
      $region9: #{tpu_custom_call.1} parent=5 // pred_check
        _
      $region10: #{tpu_custom_call.1} parent=5 // pred_check_branch
        %141 = sbr.rel (%p138) target = $region12
      $region11: #{tpu_custom_call.1} parent=5 // pred_region
        %s142 = ssub.s32 %s13, 1
        // Predicated region
        $region13: #{tpu_custom_call.1} parent=11 // pred_check
          %p143 = pneg %p34
        $region14: #{tpu_custom_call.1} parent=11 // pred_check_branch
          %145 = sbr.rel (%p143) target = $region16
        $region15: #{tpu_custom_call.1} parent=11 // pred_region
          _
        $region16: #{tpu_custom_call.1} parent=11 // pred_fallthru
          _
        // Predicated region
        $region17: #{tpu_custom_call.1} parent=11 // pred_check
          %p146 = pneg %p55
        $region18: #{tpu_custom_call.1} parent=11 // pred_check_branch
          %148 = sbr.rel (%p146) target = $region20
        $region19: #{tpu_custom_call.1} parent=11 // pred_region
          _
        $region20: #{tpu_custom_call.1} parent=11 // pred_fallthru
          _
        // Predicated region
        $region21: #{tpu_custom_call.1} parent=11 // pred_check
          %p149 = pneg %p76
        $region22: #{tpu_custom_call.1} parent=11 // pred_check_branch
          %151 = sbr.rel (%p149) target = $region24
        $region23: #{tpu_custom_call.1} parent=11 // pred_region
          _
        $region24: #{tpu_custom_call.1} parent=11 // pred_fallthru
          _
      $region12: #{tpu_custom_call.1} parent=5 // pred_fallthru
        _
      %p152 = scmp.lt.s32.totalorder %s13, 2
      // Predicated region
      $region25: #{tpu_custom_call.1} parent=5 // pred_check
        %p153 = pneg %p152
      $region26: #{tpu_custom_call.1} parent=5 // pred_check_branch
        %155 = sbr.rel (%p153) target = $region28
      $region27: #{tpu_custom_call.1} parent=5 // pred_region
        // Predicated region
        $region29: #{tpu_custom_call.1} parent=27 // pred_check
          %p156 = pneg %p96
        $region30: #{tpu_custom_call.1} parent=27 // pred_check_branch
          %158 = sbr.rel (%p156) target = $region32
        $region31: #{tpu_custom_call.1} parent=27 // pred_region
          %p159 = scmp.lt.s32.totalorder %s13, 1
          %s160 = scalar_select %p159, %s13, 1
          %s161 = smul.addr %s160, 8
          %s162 = scalar_lea.vmem %s3, %s161
        $region32: #{tpu_custom_call.1} parent=27 // pred_fallthru
          _
      $region28: #{tpu_custom_call.1} parent=5 // pred_fallthru
        _
      %p163 = scmp.le.s32.totalorder 1, %s13
      %p164 = scmp.lt.s32.totalorder %s13, 3
      %p165 = pnand %p163, %p164
      %p166 = pneg %p165
      // Predicated region
      $region33: #{tpu_custom_call.1} parent=5 // pred_check
        _
      $region34: #{tpu_custom_call.1} parent=5 // pred_check_branch
        %168 = sbr.rel (%p165) target = $region36
      $region35: #{tpu_custom_call.1} parent=5 // pred_region
        %s169 = ssub.s32 %s13, 1
        %p170 = pneg %p34
        %p171 = pneg %p31
        %p172 = pneg %p55
        %p173 = pneg %p52
        %p174 = pneg %p76
        %p175 = pneg %p73
        %p176 = scmp.lt.s32.totalorder %s18, 1
        %s177 = scalar_select %p176, %s18, 1
        %s178 = smul.addr %s177, 8
        %s179 = scalar_lea.vmem %s3, %s178
        %p180 = pneg %p102
        %p181 = pneg %p99
        %p182 = pneg %p128
        %p183 = pneg %p125
        %s184 = sand.u32 %s115, 1
        %s185 = scalar_lea.sflag [#allocation3], %s184
        %s186 = sand.u32 %s115, 1
        %s187 = smul.addr %s186, 16
        %s188 = scalar_lea.vmem [#allocation2], %s187
        %p189 = scmp.lt.s32.totalorder %s18, 1
        %s190 = scalar_select %p189, %s18, 1
        %s191 = smul.addr %s190, 8
        %s192 = scalar_lea.vmem %s3, %s191
        %v193 = vld [vmem:[%s192] sm:$0x3]
        %v195 = vlaneseq
        %v196 = vshrl.u32 %v195, 7
        %v197 = vsub.s32 0, %v196
        %v198 = vrot.slane %v193, %v197
        %v199 = vlaneseq
        %v200 = vshrl.u32 %v199, 7
        %v201 = vsub.s32 1, %v200
        %v202 = vrot.slane %v193, %v201
        %205 = vrot.lane.b32.xlu0 %v198, 34
        %v206 = vpop.permute.xlu0 %205
        %207 = vrot.lane.b32.xlu0 %v202, 34
        %v208 = vpop.permute.xlu0 %207
        %v209 = vlaneseq
        %v210 = vand.u32 %v209, 127
        %vm211 = vcmp.lt.s32.totalorder %v210, 34
        %v212 = vsel %vm211, %v206, %v208
        %v213 = vsel %vm211, %v208, %v206
        %v214 = vld [vmem:[%s2] sm:$0x3]
        %v216 = vlaneseq
        %v217 = vshrl.u32 %v216, 7
        %v218 = vsub.s32 0, %v217
        %v219 = vrot.slane %v214, %v218
        %v220 = vlaneseq
        %v221 = vshrl.u32 %v220, 7
        %v222 = vsub.s32 1, %v221
        %v223 = vrot.slane %v214, %v222
        %v226 = vmul.f32 %v213, %v219
        %v227 = vmul.f32 %v212, %v223
        %v228 = vld [vmem:[%s0] sm:$0xff]
        %230 = vset.pattern.permute.xlu0 0
        %231 = vperm.xlu0 %230, %v228
        %v232 = vpop.permute.xlu0 %231
        %v234 = vlaneseq
        %v235 = vshrl.u32 %v234, 7
        %v236 = vsub.s32 0, %v235
        %v237 = vrot.slane %v226, %v236
        %v238 = vlaneseq
        %v239 = vshrl.u32 %v238, 7
        %v240 = vsub.s32 0, %v239
        %v241 = vrot.slane %v227, %v240
        %v242 = vmul.f32 %v232, %v237
        %v243 = vmul.f32 %v232, %v241
        %v244 = vadd.f32 %v242, 0.0
        %v245 = vadd.f32 %v243, 0.0
        %246 = vrot.lane.b32.xlu0 %v198, 32
        %v247 = vpop.permute.xlu0 %246
        %248 = vrot.lane.b32.xlu0 %v202, 32
        %v249 = vpop.permute.xlu0 %248
        %vm250 = vcmp.lt.s32.totalorder %v210, 32
        %v251 = vsel %vm250, %v247, %v249
        %v252 = vsel %vm250, %v249, %v247
        %s253 = scalar_lea.vmem %s2, 2
        %v254 = vld [vmem:[%s253] sm:$0x3]
        %v256 = vlaneseq
        %v257 = vshrl.u32 %v256, 7
        %v258 = vsub.s32 0, %v257
        %v259 = vrot.slane %v254, %v258
        %v260 = vlaneseq
        %v261 = vshrl.u32 %v260, 7
        %v262 = vsub.s32 1, %v261
        %v263 = vrot.slane %v254, %v262
        %v266 = vmul.f32 %v252, %v259
        %v267 = vmul.f32 %v251, %v263
        %s268 = scalar_lea.vmem %s0, 8
        %v269 = vld [vmem:[%s268] sm:$0xff]
        %271 = vset.pattern.permute.xlu0 0
        %272 = vperm.xlu0 %271, %v269
        %v273 = vpop.permute.xlu0 %272
        %v275 = vlaneseq
        %v276 = vshrl.u32 %v275, 7
        %v277 = vsub.s32 0, %v276
        %v278 = vrot.slane %v266, %v277
        %v279 = vlaneseq
        %v280 = vshrl.u32 %v279, 7
        %v281 = vsub.s32 0, %v280
        %v282 = vrot.slane %v267, %v281
        %v283 = vmul.f32 %v273, %v278
        %v284 = vmul.f32 %v273, %v282
        %v285 = vadd.f32 %v244, %v283
        %v286 = vadd.f32 %v245, %v284
        %287 = vrot.lane.b32.xlu0 %v198, 30
        %v288 = vpop.permute.xlu0 %287
        %289 = vrot.lane.b32.xlu0 %v202, 30
        %v290 = vpop.permute.xlu0 %289
        %vm291 = vcmp.lt.s32.totalorder %v210, 30
        %v292 = vsel %vm291, %v288, %v290
        %v293 = vsel %vm291, %v290, %v288
        %s294 = scalar_lea.vmem %s2, 4
        %v295 = vld [vmem:[%s294] sm:$0x3]
        %v297 = vlaneseq
        %v298 = vshrl.u32 %v297, 7
        %v299 = vsub.s32 0, %v298
        %v300 = vrot.slane %v295, %v299
        %v301 = vlaneseq
        %v302 = vshrl.u32 %v301, 7
        %v303 = vsub.s32 1, %v302
        %v304 = vrot.slane %v295, %v303
        %v307 = vmul.f32 %v293, %v300
        %v308 = vmul.f32 %v292, %v304
        %s309 = scalar_lea.vmem %s0, 16
        %v310 = vld [vmem:[%s309] sm:$0xff]
        %312 = vset.pattern.permute.xlu0 0
        %313 = vperm.xlu0 %312, %v310
        %v314 = vpop.permute.xlu0 %313
        %v316 = vlaneseq
        %v317 = vshrl.u32 %v316, 7
        %v318 = vsub.s32 0, %v317
        %v319 = vrot.slane %v307, %v318
        %v320 = vlaneseq
        %v321 = vshrl.u32 %v320, 7
        %v322 = vsub.s32 0, %v321
        %v323 = vrot.slane %v308, %v322
        %v324 = vmul.f32 %v314, %v319
        %v325 = vmul.f32 %v314, %v323
        %v326 = vadd.f32 %v285, %v324
        %v327 = vadd.f32 %v286, %v325
        %328 = vrot.lane.b32.xlu0 %v198, 2
        %v329 = vpop.permute.xlu0 %328
        %330 = vrot.lane.b32.xlu0 %v202, 2
        %v331 = vpop.permute.xlu0 %330
        %vm332 = vcmp.lt.s32.totalorder %v210, 2
        %v333 = vsel %vm332, %v329, %v331
        %v334 = vsel %vm332, %v331, %v329
        %s335 = scalar_lea.vmem %s2, 6
        %v336 = vld [vmem:[%s335] sm:$0x3]
        %v338 = vlaneseq
        %v339 = vshrl.u32 %v338, 7
        %v340 = vsub.s32 0, %v339
        %v341 = vrot.slane %v336, %v340
        %v342 = vlaneseq
        %v343 = vshrl.u32 %v342, 7
        %v344 = vsub.s32 1, %v343
        %v345 = vrot.slane %v336, %v344
        %v348 = vmul.f32 %v334, %v341
        %v349 = vmul.f32 %v333, %v345
        %s350 = scalar_lea.vmem %s0, 24
        %v351 = vld [vmem:[%s350] sm:$0xff]
        %353 = vset.pattern.permute.xlu0 0
        %354 = vperm.xlu0 %353, %v351
        %v355 = vpop.permute.xlu0 %354
        %v357 = vlaneseq
        %v358 = vshrl.u32 %v357, 7
        %v359 = vsub.s32 0, %v358
        %v360 = vrot.slane %v348, %v359
        %v361 = vlaneseq
        %v362 = vshrl.u32 %v361, 7
        %v363 = vsub.s32 0, %v362
        %v364 = vrot.slane %v349, %v363
        %v365 = vmul.f32 %v355, %v360
        %v366 = vmul.f32 %v355, %v364
        %v367 = vadd.f32 %v326, %v365
        %v368 = vadd.f32 %v327, %v366
        %s369 = scalar_lea.vmem %s2, 8
        %v370 = vld [vmem:[%s369] sm:$0x3]
        %v371 = vmul.f32 %v193, %v370
        %s372 = scalar_lea.vmem %s0, 32
        %v373 = vld [vmem:[%s372] sm:$0xff]
        %375 = vset.pattern.permute.xlu0 0
        %376 = vperm.xlu0 %375, %v373
        %v377 = vpop.permute.xlu0 %376
        %v380 = vlaneseq
        %v381 = vshrl.u32 %v380, 7
        %v382 = vsub.s32 0, %v381
        %v383 = vrot.slane %v371, %v382
        %v384 = vlaneseq
        %v385 = vshrl.u32 %v384, 7
        %v386 = vsub.s32 1, %v385
        %v387 = vrot.slane %v371, %v386
        %v390 = vmul.f32 %v377, %v383
        %v391 = vmul.f32 %v377, %v387
        %v392 = vadd.f32 %v367, %v390
        %v393 = vadd.f32 %v368, %v391
        %394 = vrot.lane.b32.xlu0 %v198, 126
        %v395 = vpop.permute.xlu0 %394
        %396 = vrot.lane.b32.xlu0 %v202, 126
        %v397 = vpop.permute.xlu0 %396
        %vm398 = vcmp.lt.s32.totalorder %v210, 126
        %v399 = vsel %vm398, %v395, %v397
        %v400 = vsel %vm398, %v397, %v395
        %s401 = scalar_lea.vmem %s2, 10
        %v402 = vld [vmem:[%s401] sm:$0x3]
        %v404 = vlaneseq
        %v405 = vshrl.u32 %v404, 7
        %v406 = vsub.s32 0, %v405
        %v407 = vrot.slane %v402, %v406
        %v408 = vlaneseq
        %v409 = vshrl.u32 %v408, 7
        %v410 = vsub.s32 1, %v409
        %v411 = vrot.slane %v402, %v410
        %v414 = vmul.f32 %v399, %v407
        %v415 = vmul.f32 %v400, %v411
        %s416 = scalar_lea.vmem %s0, 40
        %v417 = vld [vmem:[%s416] sm:$0xff]
        %419 = vset.pattern.permute.xlu0 0
        %420 = vperm.xlu0 %419, %v417
        %v421 = vpop.permute.xlu0 %420
        %v423 = vlaneseq
        %v424 = vshrl.u32 %v423, 7
        %v425 = vsub.s32 0, %v424
        %v426 = vrot.slane %v414, %v425
        %v427 = vlaneseq
        %v428 = vshrl.u32 %v427, 7
        %v429 = vsub.s32 0, %v428
        %v430 = vrot.slane %v415, %v429
        %v431 = vmul.f32 %v421, %v426
        %v432 = vmul.f32 %v421, %v430
        %v433 = vadd.f32 %v392, %v431
        %v434 = vadd.f32 %v393, %v432
        %435 = vrot.lane.b32.xlu0 %v198, 98
        %v436 = vpop.permute.xlu0 %435
        %437 = vrot.lane.b32.xlu0 %v202, 98
        %v438 = vpop.permute.xlu0 %437
        %vm439 = vcmp.lt.s32.totalorder %v210, 98
        %v440 = vsel %vm439, %v436, %v438
        %v441 = vsel %vm439, %v438, %v436
        %s442 = scalar_lea.vmem %s2, 12
        %v443 = vld [vmem:[%s442] sm:$0x3]
        %v445 = vlaneseq
        %v446 = vshrl.u32 %v445, 7
        %v447 = vsub.s32 0, %v446
        %v448 = vrot.slane %v443, %v447
        %v449 = vlaneseq
        %v450 = vshrl.u32 %v449, 7
        %v451 = vsub.s32 1, %v450
        %v452 = vrot.slane %v443, %v451
        %v455 = vmul.f32 %v440, %v448
        %v456 = vmul.f32 %v441, %v452
        %s457 = scalar_lea.vmem %s0, 48
        %v458 = vld [vmem:[%s457] sm:$0xff]
        %460 = vset.pattern.permute.xlu0 0
        %461 = vperm.xlu0 %460, %v458
        %v462 = vpop.permute.xlu0 %461
        %v464 = vlaneseq
        %v465 = vshrl.u32 %v464, 7
        %v466 = vsub.s32 0, %v465
        %v467 = vrot.slane %v455, %v466
        %v468 = vlaneseq
        %v469 = vshrl.u32 %v468, 7
        %v470 = vsub.s32 0, %v469
        %v471 = vrot.slane %v456, %v470
        %v472 = vmul.f32 %v462, %v467
        %v473 = vmul.f32 %v462, %v471
        %v474 = vadd.f32 %v433, %v472
        %v475 = vadd.f32 %v434, %v473
        %476 = vrot.lane.b32.xlu0 %v198, 96
        %v477 = vpop.permute.xlu0 %476
        %478 = vrot.lane.b32.xlu0 %v202, 96
        %v479 = vpop.permute.xlu0 %478
        %vm480 = vcmp.lt.s32.totalorder %v210, 96
        %v481 = vsel %vm480, %v477, %v479
        %v482 = vsel %vm480, %v479, %v477
        %s483 = scalar_lea.vmem %s2, 14
        %v484 = vld [vmem:[%s483] sm:$0x3]
        %v486 = vlaneseq
        %v487 = vshrl.u32 %v486, 7
        %v488 = vsub.s32 0, %v487
        %v489 = vrot.slane %v484, %v488
        %v490 = vlaneseq
        %v491 = vshrl.u32 %v490, 7
        %v492 = vsub.s32 1, %v491
        %v493 = vrot.slane %v484, %v492
        %v496 = vmul.f32 %v481, %v489
        %v497 = vmul.f32 %v482, %v493
        %s498 = scalar_lea.vmem %s0, 56
        %v499 = vld [vmem:[%s498] sm:$0xff]
        %501 = vset.pattern.permute.xlu0 0
        %502 = vperm.xlu0 %501, %v499
        %v503 = vpop.permute.xlu0 %502
        %v505 = vlaneseq
        %v506 = vshrl.u32 %v505, 7
        %v507 = vsub.s32 0, %v506
        %v508 = vrot.slane %v496, %v507
        %v509 = vlaneseq
        %v510 = vshrl.u32 %v509, 7
        %v511 = vsub.s32 0, %v510
        %v512 = vrot.slane %v497, %v511
        %v513 = vmul.f32 %v503, %v508
        %v514 = vmul.f32 %v503, %v512
        %v515 = vadd.f32 %v474, %v513
        %v516 = vadd.f32 %v475, %v514
        %517 = vrot.lane.b32.xlu0 %v198, 94
        %v518 = vpop.permute.xlu0 %517
        %519 = vrot.lane.b32.xlu0 %v202, 94
        %v520 = vpop.permute.xlu0 %519
        %vm521 = vcmp.lt.s32.totalorder %v210, 94
        %v522 = vsel %vm521, %v518, %v520
        %v523 = vsel %vm521, %v520, %v518
        %s524 = scalar_lea.vmem %s2, 16
        %v525 = vld [vmem:[%s524] sm:$0x3]
        %v527 = vlaneseq
        %v528 = vshrl.u32 %v527, 7
        %v529 = vsub.s32 0, %v528
        %v530 = vrot.slane %v525, %v529
        %v531 = vlaneseq
        %v532 = vshrl.u32 %v531, 7
        %v533 = vsub.s32 1, %v532
        %v534 = vrot.slane %v525, %v533
        %v537 = vmul.f32 %v522, %v530
        %v538 = vmul.f32 %v523, %v534
        %s539 = scalar_lea.vmem %s0, 64
        %v540 = vld [vmem:[%s539] sm:$0xff]
        %542 = vset.pattern.permute.xlu0 0
        %543 = vperm.xlu0 %542, %v540
        %v544 = vpop.permute.xlu0 %543
        %v546 = vlaneseq
        %v547 = vshrl.u32 %v546, 7
        %v548 = vsub.s32 0, %v547
        %v549 = vrot.slane %v537, %v548
        %v550 = vlaneseq
        %v551 = vshrl.u32 %v550, 7
        %v552 = vsub.s32 0, %v551
        %v553 = vrot.slane %v538, %v552
        %v554 = vmul.f32 %v544, %v549
        %v555 = vmul.f32 %v544, %v553
        %v556 = vadd.f32 %v515, %v554
        %v557 = vadd.f32 %v516, %v555
        %s558 = scalar_lea.vmem %s192, 2
        %v559 = vld [vmem:[%s558] sm:$0x3]
        %v561 = vlaneseq
        %v562 = vshrl.u32 %v561, 7
        %v563 = vsub.s32 0, %v562
        %v564 = vrot.slane %v559, %v563
        %v565 = vlaneseq
        %v566 = vshrl.u32 %v565, 7
        %v567 = vsub.s32 1, %v566
        %v568 = vrot.slane %v559, %v567
        %571 = vrot.lane.b32.xlu0 %v564, 34
        %v572 = vpop.permute.xlu0 %571
        %573 = vrot.lane.b32.xlu0 %v568, 34
        %v574 = vpop.permute.xlu0 %573
        %v575 = vsel %vm211, %v572, %v574
        %v576 = vsel %vm211, %v574, %v572
        %v577 = vmul.f32 %v576, %v219
        %v578 = vmul.f32 %v575, %v223
        %s579 = scalar_lea.vmem %s0, 72
        %v580 = vld [vmem:[%s579] sm:$0xff]
        %582 = vset.pattern.permute.xlu0 0
        %583 = vperm.xlu0 %582, %v580
        %v584 = vpop.permute.xlu0 %583
        %v586 = vlaneseq
        %v587 = vshrl.u32 %v586, 7
        %v588 = vsub.s32 0, %v587
        %v589 = vrot.slane %v577, %v588
        %v590 = vlaneseq
        %v591 = vshrl.u32 %v590, 7
        %v592 = vsub.s32 0, %v591
        %v593 = vrot.slane %v578, %v592
        %v594 = vmul.f32 %v584, %v589
        %v595 = vmul.f32 %v584, %v593
        %v596 = vadd.f32 %v556, %v594
        %v597 = vadd.f32 %v557, %v595
        %598 = vrot.lane.b32.xlu0 %v564, 32
        %v599 = vpop.permute.xlu0 %598
        %600 = vrot.lane.b32.xlu0 %v568, 32
        %v601 = vpop.permute.xlu0 %600
        %v602 = vsel %vm250, %v599, %v601
        %v603 = vsel %vm250, %v601, %v599
        %v604 = vmul.f32 %v603, %v259
        %v605 = vmul.f32 %v602, %v263
        %s606 = scalar_lea.vmem %s0, 80
        %v607 = vld [vmem:[%s606] sm:$0xff]
        %609 = vset.pattern.permute.xlu0 0
        %610 = vperm.xlu0 %609, %v607
        %v611 = vpop.permute.xlu0 %610
        %v613 = vlaneseq
        %v614 = vshrl.u32 %v613, 7
        %v615 = vsub.s32 0, %v614
        %v616 = vrot.slane %v604, %v615
        %v617 = vlaneseq
        %v618 = vshrl.u32 %v617, 7
        %v619 = vsub.s32 0, %v618
        %v620 = vrot.slane %v605, %v619
        %v621 = vmul.f32 %v611, %v616
        %v622 = vmul.f32 %v611, %v620
        %v623 = vadd.f32 %v596, %v621
        %v624 = vadd.f32 %v597, %v622
        %625 = vrot.lane.b32.xlu0 %v564, 30
        %v626 = vpop.permute.xlu0 %625
        %627 = vrot.lane.b32.xlu0 %v568, 30
        %v628 = vpop.permute.xlu0 %627
        %v629 = vsel %vm291, %v626, %v628
        %v630 = vsel %vm291, %v628, %v626
        %v631 = vmul.f32 %v630, %v300
        %v632 = vmul.f32 %v629, %v304
        %s633 = scalar_lea.vmem %s0, 88
        %v634 = vld [vmem:[%s633] sm:$0xff]
        %636 = vset.pattern.permute.xlu0 0
        %637 = vperm.xlu0 %636, %v634
        %v638 = vpop.permute.xlu0 %637
        %v640 = vlaneseq
        %v641 = vshrl.u32 %v640, 7
        %v642 = vsub.s32 0, %v641
        %v643 = vrot.slane %v631, %v642
        %v644 = vlaneseq
        %v645 = vshrl.u32 %v644, 7
        %v646 = vsub.s32 0, %v645
        %v647 = vrot.slane %v632, %v646
        %v648 = vmul.f32 %v638, %v643
        %v649 = vmul.f32 %v638, %v647
        %v650 = vadd.f32 %v623, %v648
        %v651 = vadd.f32 %v624, %v649
        %652 = vrot.lane.b32.xlu0 %v564, 2
        %v653 = vpop.permute.xlu0 %652
        %654 = vrot.lane.b32.xlu0 %v568, 2
        %v655 = vpop.permute.xlu0 %654
        %v656 = vsel %vm332, %v653, %v655
        %v657 = vsel %vm332, %v655, %v653
        %v658 = vmul.f32 %v657, %v341
        %v659 = vmul.f32 %v656, %v345
        %s660 = scalar_lea.vmem %s0, 96
        %v661 = vld [vmem:[%s660] sm:$0xff]
        %663 = vset.pattern.permute.xlu0 0
        %664 = vperm.xlu0 %663, %v661
        %v665 = vpop.permute.xlu0 %664
        %v667 = vlaneseq
        %v668 = vshrl.u32 %v667, 7
        %v669 = vsub.s32 0, %v668
        %v670 = vrot.slane %v658, %v669
        %v671 = vlaneseq
        %v672 = vshrl.u32 %v671, 7
        %v673 = vsub.s32 0, %v672
        %v674 = vrot.slane %v659, %v673
        %v675 = vmul.f32 %v665, %v670
        %v676 = vmul.f32 %v665, %v674
        %v677 = vadd.f32 %v650, %v675
        %v678 = vadd.f32 %v651, %v676
        %v679 = vmul.f32 %v559, %v370
        %s680 = scalar_lea.vmem %s0, 104
        %v681 = vld [vmem:[%s680] sm:$0xff]
        %683 = vset.pattern.permute.xlu0 0
        %684 = vperm.xlu0 %683, %v681
        %v685 = vpop.permute.xlu0 %684
        %v688 = vlaneseq
        %v689 = vshrl.u32 %v688, 7
        %v690 = vsub.s32 0, %v689
        %v691 = vrot.slane %v679, %v690
        %v692 = vlaneseq
        %v693 = vshrl.u32 %v692, 7
        %v694 = vsub.s32 1, %v693
        %v695 = vrot.slane %v679, %v694
        %v698 = vmul.f32 %v685, %v691
        %v699 = vmul.f32 %v685, %v695
        %v700 = vadd.f32 %v677, %v698
        %v701 = vadd.f32 %v678, %v699
        %702 = vrot.lane.b32.xlu0 %v564, 126
        %v703 = vpop.permute.xlu0 %702
        %704 = vrot.lane.b32.xlu0 %v568, 126
        %v705 = vpop.permute.xlu0 %704
        %v706 = vsel %vm398, %v703, %v705
        %v707 = vsel %vm398, %v705, %v703
        %v708 = vmul.f32 %v706, %v407
        %v709 = vmul.f32 %v707, %v411
        %s710 = scalar_lea.vmem %s0, 112
        %v711 = vld [vmem:[%s710] sm:$0xff]
        %713 = vset.pattern.permute.xlu0 0
        %714 = vperm.xlu0 %713, %v711
        %v715 = vpop.permute.xlu0 %714
        %v717 = vlaneseq
        %v718 = vshrl.u32 %v717, 7
        %v719 = vsub.s32 0, %v718
        %v720 = vrot.slane %v708, %v719
        %v721 = vlaneseq
        %v722 = vshrl.u32 %v721, 7
        %v723 = vsub.s32 0, %v722
        %v724 = vrot.slane %v709, %v723
        %v725 = vmul.f32 %v715, %v720
        %v726 = vmul.f32 %v715, %v724
        %v727 = vadd.f32 %v700, %v725
        %v728 = vadd.f32 %v701, %v726
        %729 = vrot.lane.b32.xlu0 %v564, 98
        %v730 = vpop.permute.xlu0 %729
        %731 = vrot.lane.b32.xlu0 %v568, 98
        %v732 = vpop.permute.xlu0 %731
        %v733 = vsel %vm439, %v730, %v732
        %v734 = vsel %vm439, %v732, %v730
        %v735 = vmul.f32 %v733, %v448
        %v736 = vmul.f32 %v734, %v452
        %s737 = scalar_lea.vmem %s0, 120
        %v738 = vld [vmem:[%s737] sm:$0xff]
        %740 = vset.pattern.permute.xlu0 0
        %741 = vperm.xlu0 %740, %v738
        %v742 = vpop.permute.xlu0 %741
        %v744 = vlaneseq
        %v745 = vshrl.u32 %v744, 7
        %v746 = vsub.s32 0, %v745
        %v747 = vrot.slane %v735, %v746
        %v748 = vlaneseq
        %v749 = vshrl.u32 %v748, 7
        %v750 = vsub.s32 0, %v749
        %v751 = vrot.slane %v736, %v750
        %v752 = vmul.f32 %v742, %v747
        %v753 = vmul.f32 %v742, %v751
        %v754 = vadd.f32 %v727, %v752
        %v755 = vadd.f32 %v728, %v753
        %756 = vrot.lane.b32.xlu0 %v564, 96
        %v757 = vpop.permute.xlu0 %756
        %758 = vrot.lane.b32.xlu0 %v568, 96
        %v759 = vpop.permute.xlu0 %758
        %v760 = vsel %vm480, %v757, %v759
        %v761 = vsel %vm480, %v759, %v757
        %v762 = vmul.f32 %v760, %v489
        %v763 = vmul.f32 %v761, %v493
        %s764 = scalar_lea.vmem %s0, 128
        %v765 = vld [vmem:[%s764] sm:$0xff]
        %767 = vset.pattern.permute.xlu0 0
        %768 = vperm.xlu0 %767, %v765
        %v769 = vpop.permute.xlu0 %768
        %v771 = vlaneseq
        %v772 = vshrl.u32 %v771, 7
        %v773 = vsub.s32 0, %v772
        %v774 = vrot.slane %v762, %v773
        %v775 = vlaneseq
        %v776 = vshrl.u32 %v775, 7
        %v777 = vsub.s32 0, %v776
        %v778 = vrot.slane %v763, %v777
        %v779 = vmul.f32 %v769, %v774
        %v780 = vmul.f32 %v769, %v778
        %v781 = vadd.f32 %v754, %v779
        %v782 = vadd.f32 %v755, %v780
        %783 = vrot.lane.b32.xlu0 %v564, 94
        %v784 = vpop.permute.xlu0 %783
        %785 = vrot.lane.b32.xlu0 %v568, 94
        %v786 = vpop.permute.xlu0 %785
        %v787 = vsel %vm521, %v784, %v786
        %v788 = vsel %vm521, %v786, %v784
        %v789 = vmul.f32 %v787, %v530
        %v790 = vmul.f32 %v788, %v534
        %s791 = scalar_lea.vmem %s0, 136
        %v792 = vld [vmem:[%s791] sm:$0xff]
        %794 = vset.pattern.permute.xlu0 0
        %795 = vperm.xlu0 %794, %v792
        %v796 = vpop.permute.xlu0 %795
        %v798 = vlaneseq
        %v799 = vshrl.u32 %v798, 7
        %v800 = vsub.s32 0, %v799
        %v801 = vrot.slane %v789, %v800
        %v802 = vlaneseq
        %v803 = vshrl.u32 %v802, 7
        %v804 = vsub.s32 0, %v803
        %v805 = vrot.slane %v790, %v804
        %v806 = vmul.f32 %v796, %v801
        %v807 = vmul.f32 %v796, %v805
        %v808 = vadd.f32 %v781, %v806
        %v809 = vadd.f32 %v782, %v807
        %s810 = scalar_lea.vmem %s192, 4
        %v811 = vld [vmem:[%s810] sm:$0x3]
        %v813 = vlaneseq
        %v814 = vshrl.u32 %v813, 7
        %v815 = vsub.s32 0, %v814
        %v816 = vrot.slane %v811, %v815
        %v817 = vlaneseq
        %v818 = vshrl.u32 %v817, 7
        %v819 = vsub.s32 1, %v818
        %v820 = vrot.slane %v811, %v819
        %823 = vrot.lane.b32.xlu0 %v816, 34
        %v824 = vpop.permute.xlu0 %823
        %825 = vrot.lane.b32.xlu0 %v820, 34
        %v826 = vpop.permute.xlu0 %825
        %v827 = vsel %vm211, %v824, %v826
        %v828 = vsel %vm211, %v826, %v824
        %v829 = vmul.f32 %v828, %v219
        %v830 = vmul.f32 %v827, %v223
        %s831 = scalar_lea.vmem %s0, 144
        %v832 = vld [vmem:[%s831] sm:$0xff]
        %834 = vset.pattern.permute.xlu0 0
        %835 = vperm.xlu0 %834, %v832
        %v836 = vpop.permute.xlu0 %835
        %v838 = vlaneseq
        %v839 = vshrl.u32 %v838, 7
        %v840 = vsub.s32 0, %v839
        %v841 = vrot.slane %v829, %v840
        %v842 = vlaneseq
        %v843 = vshrl.u32 %v842, 7
        %v844 = vsub.s32 0, %v843
        %v845 = vrot.slane %v830, %v844
        %v846 = vmul.f32 %v836, %v841
        %v847 = vmul.f32 %v836, %v845
        %v848 = vadd.f32 %v808, %v846
        %v849 = vadd.f32 %v809, %v847
        %850 = vrot.lane.b32.xlu0 %v816, 32
        %v851 = vpop.permute.xlu0 %850
        %852 = vrot.lane.b32.xlu0 %v820, 32
        %v853 = vpop.permute.xlu0 %852
        %v854 = vsel %vm250, %v851, %v853
        %v855 = vsel %vm250, %v853, %v851
        %v856 = vmul.f32 %v855, %v259
        %v857 = vmul.f32 %v854, %v263
        %s858 = scalar_lea.vmem %s0, 152
        %v859 = vld [vmem:[%s858] sm:$0xff]
        %861 = vset.pattern.permute.xlu0 0
        %862 = vperm.xlu0 %861, %v859
        %v863 = vpop.permute.xlu0 %862
        %v865 = vlaneseq
        %v866 = vshrl.u32 %v865, 7
        %v867 = vsub.s32 0, %v866
        %v868 = vrot.slane %v856, %v867
        %v869 = vlaneseq
        %v870 = vshrl.u32 %v869, 7
        %v871 = vsub.s32 0, %v870
        %v872 = vrot.slane %v857, %v871
        %v873 = vmul.f32 %v863, %v868
        %v874 = vmul.f32 %v863, %v872
        %v875 = vadd.f32 %v848, %v873
        %v876 = vadd.f32 %v849, %v874
        %877 = vrot.lane.b32.xlu0 %v816, 30
        %v878 = vpop.permute.xlu0 %877
        %879 = vrot.lane.b32.xlu0 %v820, 30
        %v880 = vpop.permute.xlu0 %879
        %v881 = vsel %vm291, %v878, %v880
        %v882 = vsel %vm291, %v880, %v878
        %v883 = vmul.f32 %v882, %v300
        %v884 = vmul.f32 %v881, %v304
        %s885 = scalar_lea.vmem %s0, 160
        %v886 = vld [vmem:[%s885] sm:$0xff]
        %888 = vset.pattern.permute.xlu0 0
        %889 = vperm.xlu0 %888, %v886
        %v890 = vpop.permute.xlu0 %889
        %v892 = vlaneseq
        %v893 = vshrl.u32 %v892, 7
        %v894 = vsub.s32 0, %v893
        %v895 = vrot.slane %v883, %v894
        %v896 = vlaneseq
        %v897 = vshrl.u32 %v896, 7
        %v898 = vsub.s32 0, %v897
        %v899 = vrot.slane %v884, %v898
        %v900 = vmul.f32 %v890, %v895
        %v901 = vmul.f32 %v890, %v899
        %v902 = vadd.f32 %v875, %v900
        %v903 = vadd.f32 %v876, %v901
        %904 = vrot.lane.b32.xlu0 %v816, 2
        %v905 = vpop.permute.xlu0 %904
        %906 = vrot.lane.b32.xlu0 %v820, 2
        %v907 = vpop.permute.xlu0 %906
        %v908 = vsel %vm332, %v905, %v907
        %v909 = vsel %vm332, %v907, %v905
        %v910 = vmul.f32 %v909, %v341
        %v911 = vmul.f32 %v908, %v345
        %s912 = scalar_lea.vmem %s0, 168
        %v913 = vld [vmem:[%s912] sm:$0xff]
        %915 = vset.pattern.permute.xlu0 0
        %916 = vperm.xlu0 %915, %v913
        %v917 = vpop.permute.xlu0 %916
        %v919 = vlaneseq
        %v920 = vshrl.u32 %v919, 7
        %v921 = vsub.s32 0, %v920
        %v922 = vrot.slane %v910, %v921
        %v923 = vlaneseq
        %v924 = vshrl.u32 %v923, 7
        %v925 = vsub.s32 0, %v924
        %v926 = vrot.slane %v911, %v925
        %v927 = vmul.f32 %v917, %v922
        %v928 = vmul.f32 %v917, %v926
        %v929 = vadd.f32 %v902, %v927
        %v930 = vadd.f32 %v903, %v928
        %v931 = vmul.f32 %v811, %v370
        %s932 = scalar_lea.vmem %s0, 176
        %v933 = vld [vmem:[%s932] sm:$0xff]
        %935 = vset.pattern.permute.xlu0 0
        %936 = vperm.xlu0 %935, %v933
        %v937 = vpop.permute.xlu0 %936
        %v940 = vlaneseq
        %v941 = vshrl.u32 %v940, 7
        %v942 = vsub.s32 0, %v941
        %v943 = vrot.slane %v931, %v942
        %v944 = vlaneseq
        %v945 = vshrl.u32 %v944, 7
        %v946 = vsub.s32 1, %v945
        %v947 = vrot.slane %v931, %v946
        %v950 = vmul.f32 %v937, %v943
        %v951 = vmul.f32 %v937, %v947
        %v952 = vadd.f32 %v929, %v950
        %v953 = vadd.f32 %v930, %v951
        %954 = vrot.lane.b32.xlu0 %v816, 126
        %v955 = vpop.permute.xlu0 %954
        %956 = vrot.lane.b32.xlu0 %v820, 126
        %v957 = vpop.permute.xlu0 %956
        %v958 = vsel %vm398, %v955, %v957
        %v959 = vsel %vm398, %v957, %v955
        %v960 = vmul.f32 %v958, %v407
        %v961 = vmul.f32 %v959, %v411
        %s962 = scalar_lea.vmem %s0, 184
        %v963 = vld [vmem:[%s962] sm:$0xff]
        %965 = vset.pattern.permute.xlu0 0
        %966 = vperm.xlu0 %965, %v963
        %v967 = vpop.permute.xlu0 %966
        %v969 = vlaneseq
        %v970 = vshrl.u32 %v969, 7
        %v971 = vsub.s32 0, %v970
        %v972 = vrot.slane %v960, %v971
        %v973 = vlaneseq
        %v974 = vshrl.u32 %v973, 7
        %v975 = vsub.s32 0, %v974
        %v976 = vrot.slane %v961, %v975
        %v977 = vmul.f32 %v967, %v972
        %v978 = vmul.f32 %v967, %v976
        %v979 = vadd.f32 %v952, %v977
        %v980 = vadd.f32 %v953, %v978
        %981 = vrot.lane.b32.xlu0 %v816, 98
        %v982 = vpop.permute.xlu0 %981
        %983 = vrot.lane.b32.xlu0 %v820, 98
        %v984 = vpop.permute.xlu0 %983
        %v985 = vsel %vm439, %v982, %v984
        %v986 = vsel %vm439, %v984, %v982
        %v987 = vmul.f32 %v985, %v448
        %v988 = vmul.f32 %v986, %v452
        %s989 = scalar_lea.vmem %s0, 192
        %v990 = vld [vmem:[%s989] sm:$0xff]
        %992 = vset.pattern.permute.xlu0 0
        %993 = vperm.xlu0 %992, %v990
        %v994 = vpop.permute.xlu0 %993
        %v996 = vlaneseq
        %v997 = vshrl.u32 %v996, 7
        %v998 = vsub.s32 0, %v997
        %v999 = vrot.slane %v987, %v998
        %v1000 = vlaneseq
        %v1001 = vshrl.u32 %v1000, 7
        %v1002 = vsub.s32 0, %v1001
        %v1003 = vrot.slane %v988, %v1002
        %v1004 = vmul.f32 %v994, %v999
        %v1005 = vmul.f32 %v994, %v1003
        %v1006 = vadd.f32 %v979, %v1004
        %v1007 = vadd.f32 %v980, %v1005
        %1008 = vrot.lane.b32.xlu0 %v816, 96
        %v1009 = vpop.permute.xlu0 %1008
        %1010 = vrot.lane.b32.xlu0 %v820, 96
        %v1011 = vpop.permute.xlu0 %1010
        %v1012 = vsel %vm480, %v1009, %v1011
        %v1013 = vsel %vm480, %v1011, %v1009
        %v1014 = vmul.f32 %v1012, %v489
        %v1015 = vmul.f32 %v1013, %v493
        %s1016 = scalar_lea.vmem %s0, 200
        %v1017 = vld [vmem:[%s1016] sm:$0xff]
        %1019 = vset.pattern.permute.xlu0 0
        %1020 = vperm.xlu0 %1019, %v1017
        %v1021 = vpop.permute.xlu0 %1020
        %v1023 = vlaneseq
        %v1024 = vshrl.u32 %v1023, 7
        %v1025 = vsub.s32 0, %v1024
        %v1026 = vrot.slane %v1014, %v1025
        %v1027 = vlaneseq
        %v1028 = vshrl.u32 %v1027, 7
        %v1029 = vsub.s32 0, %v1028
        %v1030 = vrot.slane %v1015, %v1029
        %v1031 = vmul.f32 %v1021, %v1026
        %v1032 = vmul.f32 %v1021, %v1030
        %v1033 = vadd.f32 %v1006, %v1031
        %v1034 = vadd.f32 %v1007, %v1032
        %1035 = vrot.lane.b32.xlu0 %v816, 94
        %v1036 = vpop.permute.xlu0 %1035
        %1037 = vrot.lane.b32.xlu0 %v820, 94
        %v1038 = vpop.permute.xlu0 %1037
        %v1039 = vsel %vm521, %v1036, %v1038
        %v1040 = vsel %vm521, %v1038, %v1036
        %v1041 = vmul.f32 %v1039, %v530
        %v1042 = vmul.f32 %v1040, %v534
        %s1043 = scalar_lea.vmem %s0, 208
        %v1044 = vld [vmem:[%s1043] sm:$0xff]
        %1046 = vset.pattern.permute.xlu0 0
        %1047 = vperm.xlu0 %1046, %v1044
        %v1048 = vpop.permute.xlu0 %1047
        %v1050 = vlaneseq
        %v1051 = vshrl.u32 %v1050, 7
        %v1052 = vsub.s32 0, %v1051
        %v1053 = vrot.slane %v1041, %v1052
        %v1054 = vlaneseq
        %v1055 = vshrl.u32 %v1054, 7
        %v1056 = vsub.s32 0, %v1055
        %v1057 = vrot.slane %v1042, %v1056
        %v1058 = vmul.f32 %v1048, %v1053
        %v1059 = vmul.f32 %v1048, %v1057
        %v1060 = vadd.f32 %v1033, %v1058
        %v1061 = vadd.f32 %v1034, %v1059
        %s1062 = scalar_lea.vmem %s192, 6
        %v1063 = vld [vmem:[%s1062] sm:$0x3]
        %v1065 = vlaneseq
        %v1066 = vshrl.u32 %v1065, 7
        %v1067 = vsub.s32 0, %v1066
        %v1068 = vrot.slane %v1063, %v1067
        %v1069 = vlaneseq
        %v1070 = vshrl.u32 %v1069, 7
        %v1071 = vsub.s32 1, %v1070
        %v1072 = vrot.slane %v1063, %v1071
        %1075 = vrot.lane.b32.xlu0 %v1068, 34
        %v1076 = vpop.permute.xlu0 %1075
        %1077 = vrot.lane.b32.xlu0 %v1072, 34
        %v1078 = vpop.permute.xlu0 %1077
        %v1079 = vsel %vm211, %v1076, %v1078
        %v1080 = vsel %vm211, %v1078, %v1076
        %v1081 = vmul.f32 %v1080, %v219
        %v1082 = vmul.f32 %v1079, %v223
        %s1083 = scalar_lea.vmem %s0, 216
        %v1084 = vld [vmem:[%s1083] sm:$0xff]
        %1086 = vset.pattern.permute.xlu0 0
        %1087 = vperm.xlu0 %1086, %v1084
        %v1088 = vpop.permute.xlu0 %1087
        %v1090 = vlaneseq
        %v1091 = vshrl.u32 %v1090, 7
        %v1092 = vsub.s32 0, %v1091
        %v1093 = vrot.slane %v1081, %v1092
        %v1094 = vlaneseq
        %v1095 = vshrl.u32 %v1094, 7
        %v1096 = vsub.s32 0, %v1095
        %v1097 = vrot.slane %v1082, %v1096
        %v1098 = vmul.f32 %v1088, %v1093
        %v1099 = vmul.f32 %v1088, %v1097
        %v1100 = vadd.f32 %v1060, %v1098
        %v1101 = vadd.f32 %v1061, %v1099
        %1102 = vrot.lane.b32.xlu0 %v1068, 32
        %v1103 = vpop.permute.xlu0 %1102
        %1104 = vrot.lane.b32.xlu0 %v1072, 32
        %v1105 = vpop.permute.xlu0 %1104
        %v1106 = vsel %vm250, %v1103, %v1105
        %v1107 = vsel %vm250, %v1105, %v1103
        %v1108 = vmul.f32 %v1107, %v259
        %v1109 = vmul.f32 %v1106, %v263
        %s1110 = scalar_lea.vmem %s0, 224
        %v1111 = vld [vmem:[%s1110] sm:$0xff]
        %1113 = vset.pattern.permute.xlu0 0
        %1114 = vperm.xlu0 %1113, %v1111
        %v1115 = vpop.permute.xlu0 %1114
        %v1117 = vlaneseq
        %v1118 = vshrl.u32 %v1117, 7
        %v1119 = vsub.s32 0, %v1118
        %v1120 = vrot.slane %v1108, %v1119
        %v1121 = vlaneseq
        %v1122 = vshrl.u32 %v1121, 7
        %v1123 = vsub.s32 0, %v1122
        %v1124 = vrot.slane %v1109, %v1123
        %v1125 = vmul.f32 %v1115, %v1120
        %v1126 = vmul.f32 %v1115, %v1124
        %v1127 = vadd.f32 %v1100, %v1125
        %v1128 = vadd.f32 %v1101, %v1126
        %1129 = vrot.lane.b32.xlu0 %v1068, 30
        %v1130 = vpop.permute.xlu0 %1129
        %1131 = vrot.lane.b32.xlu0 %v1072, 30
        %v1132 = vpop.permute.xlu0 %1131
        %v1133 = vsel %vm291, %v1130, %v1132
        %v1134 = vsel %vm291, %v1132, %v1130
        %v1135 = vmul.f32 %v1134, %v300
        %v1136 = vmul.f32 %v1133, %v304
        %s1137 = scalar_lea.vmem %s0, 232
        %v1138 = vld [vmem:[%s1137] sm:$0xff]
        %1140 = vset.pattern.permute.xlu0 0
        %1141 = vperm.xlu0 %1140, %v1138
        %v1142 = vpop.permute.xlu0 %1141
        %v1144 = vlaneseq
        %v1145 = vshrl.u32 %v1144, 7
        %v1146 = vsub.s32 0, %v1145
        %v1147 = vrot.slane %v1135, %v1146
        %v1148 = vlaneseq
        %v1149 = vshrl.u32 %v1148, 7
        %v1150 = vsub.s32 0, %v1149
        %v1151 = vrot.slane %v1136, %v1150
        %v1152 = vmul.f32 %v1142, %v1147
        %v1153 = vmul.f32 %v1142, %v1151
        %v1154 = vadd.f32 %v1127, %v1152
        %v1155 = vadd.f32 %v1128, %v1153
        %1156 = vrot.lane.b32.xlu0 %v1068, 2
        %v1157 = vpop.permute.xlu0 %1156
        %1158 = vrot.lane.b32.xlu0 %v1072, 2
        %v1159 = vpop.permute.xlu0 %1158
        %v1160 = vsel %vm332, %v1157, %v1159
        %v1161 = vsel %vm332, %v1159, %v1157
        %v1162 = vmul.f32 %v1161, %v341
        %v1163 = vmul.f32 %v1160, %v345
        %s1164 = scalar_lea.vmem %s0, 240
        %v1165 = vld [vmem:[%s1164] sm:$0xff]
        %1167 = vset.pattern.permute.xlu0 0
        %1168 = vperm.xlu0 %1167, %v1165
        %v1169 = vpop.permute.xlu0 %1168
        %v1171 = vlaneseq
        %v1172 = vshrl.u32 %v1171, 7
        %v1173 = vsub.s32 0, %v1172
        %v1174 = vrot.slane %v1162, %v1173
        %v1175 = vlaneseq
        %v1176 = vshrl.u32 %v1175, 7
        %v1177 = vsub.s32 0, %v1176
        %v1178 = vrot.slane %v1163, %v1177
        %v1179 = vmul.f32 %v1169, %v1174
        %v1180 = vmul.f32 %v1169, %v1178
        %v1181 = vadd.f32 %v1154, %v1179
        %v1182 = vadd.f32 %v1155, %v1180
        %v1183 = vmul.f32 %v1063, %v370
        %s1184 = scalar_lea.vmem %s0, 248
        %v1185 = vld [vmem:[%s1184] sm:$0xff]
        %1187 = vset.pattern.permute.xlu0 0
        %1188 = vperm.xlu0 %1187, %v1185
        %v1189 = vpop.permute.xlu0 %1188
        %v1192 = vlaneseq
        %v1193 = vshrl.u32 %v1192, 7
        %v1194 = vsub.s32 0, %v1193
        %v1195 = vrot.slane %v1183, %v1194
        %v1196 = vlaneseq
        %v1197 = vshrl.u32 %v1196, 7
        %v1198 = vsub.s32 1, %v1197
        %v1199 = vrot.slane %v1183, %v1198
        %v1202 = vmul.f32 %v1189, %v1195
        %v1203 = vmul.f32 %v1189, %v1199
        %v1204 = vadd.f32 %v1181, %v1202
        %v1205 = vadd.f32 %v1182, %v1203
        %1206 = vrot.lane.b32.xlu0 %v1068, 126
        %v1207 = vpop.permute.xlu0 %1206
        %1208 = vrot.lane.b32.xlu0 %v1072, 126
        %v1209 = vpop.permute.xlu0 %1208
        %v1210 = vsel %vm398, %v1207, %v1209
        %v1211 = vsel %vm398, %v1209, %v1207
        %v1212 = vmul.f32 %v1210, %v407
        %v1213 = vmul.f32 %v1211, %v411
        %s1214 = scalar_lea.vmem %s0, 256
        %v1215 = vld [vmem:[%s1214] sm:$0xff]
        %1217 = vset.pattern.permute.xlu0 0
        %1218 = vperm.xlu0 %1217, %v1215
        %v1219 = vpop.permute.xlu0 %1218
        %v1221 = vlaneseq
        %v1222 = vshrl.u32 %v1221, 7
        %v1223 = vsub.s32 0, %v1222
        %v1224 = vrot.slane %v1212, %v1223
        %v1225 = vlaneseq
        %v1226 = vshrl.u32 %v1225, 7
        %v1227 = vsub.s32 0, %v1226
        %v1228 = vrot.slane %v1213, %v1227
        %v1229 = vmul.f32 %v1219, %v1224
        %v1230 = vmul.f32 %v1219, %v1228
        %v1231 = vadd.f32 %v1204, %v1229
        %v1232 = vadd.f32 %v1205, %v1230
        %1233 = vrot.lane.b32.xlu0 %v1068, 98
        %v1234 = vpop.permute.xlu0 %1233
        %1235 = vrot.lane.b32.xlu0 %v1072, 98
        %v1236 = vpop.permute.xlu0 %1235
        %v1237 = vsel %vm439, %v1234, %v1236
        %v1238 = vsel %vm439, %v1236, %v1234
        %v1239 = vmul.f32 %v1237, %v448
        %v1240 = vmul.f32 %v1238, %v452
        %s1241 = scalar_lea.vmem %s0, 264
        %v1242 = vld [vmem:[%s1241] sm:$0xff]
        %1244 = vset.pattern.permute.xlu0 0
        %1245 = vperm.xlu0 %1244, %v1242
        %v1246 = vpop.permute.xlu0 %1245
        %v1248 = vlaneseq
        %v1249 = vshrl.u32 %v1248, 7
        %v1250 = vsub.s32 0, %v1249
        %v1251 = vrot.slane %v1239, %v1250
        %v1252 = vlaneseq
        %v1253 = vshrl.u32 %v1252, 7
        %v1254 = vsub.s32 0, %v1253
        %v1255 = vrot.slane %v1240, %v1254
        %v1256 = vmul.f32 %v1246, %v1251
        %v1257 = vmul.f32 %v1246, %v1255
        %v1258 = vadd.f32 %v1231, %v1256
        %v1259 = vadd.f32 %v1232, %v1257
        %1260 = vrot.lane.b32.xlu0 %v1068, 96
        %v1261 = vpop.permute.xlu0 %1260
        %1262 = vrot.lane.b32.xlu0 %v1072, 96
        %v1263 = vpop.permute.xlu0 %1262
        %v1264 = vsel %vm480, %v1261, %v1263
        %v1265 = vsel %vm480, %v1263, %v1261
        %v1266 = vmul.f32 %v1264, %v489
        %v1267 = vmul.f32 %v1265, %v493
        %s1268 = scalar_lea.vmem %s0, 272
        %v1269 = vld [vmem:[%s1268] sm:$0xff]
        %1271 = vset.pattern.permute.xlu0 0
        %1272 = vperm.xlu0 %1271, %v1269
        %v1273 = vpop.permute.xlu0 %1272
        %v1275 = vlaneseq
        %v1276 = vshrl.u32 %v1275, 7
        %v1277 = vsub.s32 0, %v1276
        %v1278 = vrot.slane %v1266, %v1277
        %v1279 = vlaneseq
        %v1280 = vshrl.u32 %v1279, 7
        %v1281 = vsub.s32 0, %v1280
        %v1282 = vrot.slane %v1267, %v1281
        %v1283 = vmul.f32 %v1273, %v1278
        %v1284 = vmul.f32 %v1273, %v1282
        %v1285 = vadd.f32 %v1258, %v1283
        %v1286 = vadd.f32 %v1259, %v1284
        %1287 = vrot.lane.b32.xlu0 %v1068, 94
        %v1288 = vpop.permute.xlu0 %1287
        %1289 = vrot.lane.b32.xlu0 %v1072, 94
        %v1290 = vpop.permute.xlu0 %1289
        %v1291 = vsel %vm521, %v1288, %v1290
        %v1292 = vsel %vm521, %v1290, %v1288
        %v1293 = vmul.f32 %v1291, %v530
        %v1294 = vmul.f32 %v1292, %v534
        %s1295 = scalar_lea.vmem %s0, 280
        %v1296 = vld [vmem:[%s1295] sm:$0xff]
        %1298 = vset.pattern.permute.xlu0 0
        %1299 = vperm.xlu0 %1298, %v1296
        %v1300 = vpop.permute.xlu0 %1299
        %v1302 = vlaneseq
        %v1303 = vshrl.u32 %v1302, 7
        %v1304 = vsub.s32 0, %v1303
        %v1305 = vrot.slane %v1293, %v1304
        %v1306 = vlaneseq
        %v1307 = vshrl.u32 %v1306, 7
        %v1308 = vsub.s32 0, %v1307
        %v1309 = vrot.slane %v1294, %v1308
        %v1310 = vmul.f32 %v1300, %v1305
        %v1311 = vmul.f32 %v1300, %v1309
        %v1312 = vadd.f32 %v1285, %v1310
        %v1313 = vadd.f32 %v1286, %v1311
        %v1314 = vld [vmem:[%s1] sm:$0xff]
        %1316 = vset.pattern.permute.xlu0 0
        %1317 = vperm.xlu0 %1316, %v1314
        %v1318 = vpop.permute.xlu0 %1317
        %v1320 = vadd.f32 %v1312, %v1318
        %v1321 = vadd.f32 %v1313, %v1318
        %v1322 = vmax.f32 %v1320, 0.0
        %v1323 = vmax.f32 %v1321, 0.0
        %1324 = vst [vmem:[%s188] sm:$0xff] %v1322
        %1325 = vst [vmem:[%s188 + $0x8] sm:$0xff] %v1323
        %s1326 = sand.u32 %s115, 1
        %s1327 = scalar_lea.sflag [#allocation3], %s1326
        %s1328 = sand.u32 %s115, 1
        %s1329 = smul.addr %s1328, 16
        %s1330 = scalar_lea.vmem [#allocation2], %s1329
        // Predicated region
        $region37: #{tpu_custom_call.1} parent=35 // pred_check
          %p1331 = pneg %p125
        $region38: #{tpu_custom_call.1} parent=35 // pred_check_branch
          %1333 = sbr.rel (%p1331) target = $region40
        $region39: #{tpu_custom_call.1} parent=35 // pred_region
          %s1335 = ssub.s32 256, 256
          %1336 = vsyncadd %s1327, %s1335
          %s1337 = smul.addr %s18, 2
          %s1338 = smul.addr %s1337, 128
          %s1339 = scalar_lea.hbm %s4, %s1338
          %s1341 = sshll.u32 %s1330, 4
          %s1342 = int_to_ptr.vmem [resolvable:$true] %s1341
          %1344 = dma.vmem_to_hbm [thread:$0]  %s1342, 256, %s1339, %s1327
        $region40: #{tpu_custom_call.1} parent=35 // pred_fallthru
          _
      $region36: #{tpu_custom_call.1} parent=5 // pred_fallthru
        _
      %p1345 = scmp.le.s32.totalorder 2, %s13
      // Predicated region
      $region41: #{tpu_custom_call.1} parent=5 // pred_check
        %p1346 = pneg %p1345
      $region42: #{tpu_custom_call.1} parent=5 // pred_check_branch
        %1348 = sbr.rel (%p1346) target = $region44
      $region43: #{tpu_custom_call.1} parent=5 // pred_region
        %s1349 = ssub.s32 %s13, 2
        // Predicated region
        $region45: #{tpu_custom_call.1} parent=43 // pred_check
          %p1350 = pneg %p131
        $region46: #{tpu_custom_call.1} parent=43 // pred_check_branch
          %1352 = sbr.rel (%p1350) target = $region48
        $region47: #{tpu_custom_call.1} parent=43 // pred_region
          %s1353 = sand.u32 %s116, 1
          %s1354 = scalar_lea.sflag [#allocation3], %s1353
          %s1355 = sand.u32 %s116, 1
          %s1356 = smul.addr %s1355, 16
          %s1357 = scalar_lea.vmem [#allocation2], %s1356
          %1358 = dma.done %s1354, 256
        $region48: #{tpu_custom_call.1} parent=43 // pred_fallthru
          _
      $region44: #{tpu_custom_call.1} parent=5 // pred_fallthru
        _
    $region6: #{tpu_custom_call.1} parent=1 // loop_footer
      %s17 = sadd.s32 1, %s13
    $region7: #{tpu_custom_call.1} parent=1 // loop_footer_branch
      %12 = sbr.rel target = $region3
    $region8: #{tpu_custom_call.1} parent=1 // loop_exit
      _
    %1359 = vsyncpa [#allocation3], 1
    %s1360 = scalar_lea.sflag [#allocation3], 1
    %1361 = vsyncpa %s1360, 1

</llo_original>
